<compile_context>
chip_gen: v7x
topology: tpu7x:2x2x1
jax: 0.10.0
libtpu: 0.0.40
codegen_flags: <defaults>
</compile_context>

<pallas_src>
import jax
import jax.numpy as jnp
from jax import lax
from jax.experimental import pallas as pl
from jax.experimental.pallas import tpu as pltpu
import numpy as np


# ----------------------------------------------------------------------------
# Pallas kernel: per (batch-block, time-chunk) grid step
# ----------------------------------------------------------------------------
def atae_kernel(x_ref, asp_ref, wx_ref, wasp_ref, whh_ref, bias_ref,
                wattn_ref, wfc_ref, bfc_ref, out_ref,
                gx_sc, gasp_sc, h_sc, c_sc, hs_sc):
    # x_ref   : (Tc*Bb, E)  bf16  time-major rows (row t*Bb + b) for this chunk
    # asp_ref : (Bb, E)     bf16  per-batch aspect mean
    # wx_ref  : (E, 4H) bf16, wasp_ref: (E, 4H) bf16, whh_ref: (H, 4H) bf16
    # bias_ref: (1, 4H) f32  (b_ih + b_hh), gate columns permuted to [i,f,o,g]
    # wattn   : (1, H)  f32 ; wfc: (H, C) bf16 ; bfc: (1, C) f32
    # out_ref : (Bb, C) f32
    # gx_sc   : (Tc*Bb, 4H) f32 ; gasp_sc: (Bb, 4H) f32
    # h_sc/c_sc: (Bb, H) f32    ; hs_sc  : (S, Bb, H) f32
    H = whh_ref.shape[0]
    Bb = out_ref.shape[0]
    Tc = x_ref.shape[0] // Bb
    S = hs_sc.shape[0]
    c_idx = pl.program_id(1)
    n_c = pl.num_programs(1)

    # ---- start of a batch block's time sweep: reset state, aspect proj ----
    @pl.when(c_idx == 0)
    def _init():
        h_sc[...] = jnp.zeros_like(h_sc)
        c_sc[...] = jnp.zeros_like(c_sc)
        # Aspect projection + bias is time-invariant: one small MXU matmul
        # per batch block, broadcast-added to every timestep's gates.
        gasp_sc[...] = (jnp.dot(asp_ref[...], wasp_ref[...],
                                preferred_element_type=jnp.float32)
                        + bias_ref[...])

    # ---- hoisted input projection for this time chunk (one bf16 matmul) ---
    gx_sc[...] = jnp.dot(x_ref[...], wx_ref[...],
                         preferred_element_type=jnp.float32)       # (Tc*Bb,4H)

    whh = whh_ref[...]                                             # (H,4H) bf16
    gasp = gasp_sc[...]                                            # (Bb,4H) f32
    h = h_sc[...]
    c = c_sc[...]

    # ---- statically unrolled recurrence over the Tc steps of this chunk ---
    for t in range(Tc):
        gates = (gx_sc[pl.ds(t * Bb, Bb), :] + gasp
                 + jnp.dot(h.astype(whh.dtype), whh,
                           preferred_element_type=jnp.float32))    # (Bb,4H)
        # gate columns pre-permuted to [i, f, o, g]: 2 EUP pushes per step
        sg = jax.nn.sigmoid(gates[:, 0:3 * H])
        g = jnp.tanh(gates[:, 3 * H:4 * H])
        i_g = sg[:, 0:H]
        f_g = sg[:, H:2 * H]
        o_g = sg[:, 2 * H:3 * H]
        c = f_g * c + i_g * g
        h = o_g * jnp.tanh(c)
        hs_sc[c_idx * Tc + t] = h                                  # (Bb,H) store

    # carry state to the next time chunk
    h_sc[...] = h
    c_sc[...] = c

    # ---- last chunk: attention + context + fc, single (Bb, C) store -------
    @pl.when(c_idx == n_c - 1)
    def _finish():
        # attention Linear(H,1) as a lane reduce; the scalar attention bias is
        # omitted because a constant added to every logit cancels in softmax.
        w_row = wattn_ref[...]                                     # (1, H)
        m = jnp.full((Bb, 1), -jnp.inf, dtype=jnp.float32)
        logits = []
        for t in range(S):
            ht = hs_sc[t]                                          # (Bb, H)
            l = jnp.sum(ht * w_row, axis=-1, keepdims=True)        # (Bb, 1)
            logits.append(l)
            m = jnp.maximum(m, l)
        denom = jnp.zeros((Bb, 1), jnp.float32)
        ctx = jnp.zeros((Bb, H), jnp.float32)
        for t in range(S):
            e = jnp.exp(logits[t] - m)
            denom = denom + e
            ctx = ctx + e * hs_sc[t]
        context = ctx / denom                                      # (Bb, H) f32
        out_ref[...] = (jnp.dot(context.astype(wfc_ref.dtype), wfc_ref[...],
                                preferred_element_type=jnp.float32)
                        + bfc_ref[...])                            # (Bb, C)


# ----------------------------------------------------------------------------
# Wrapper: embedding gather, aspect mean, layout + pallas_call
# ----------------------------------------------------------------------------
def atae_lstm_forward(x_ids, aspect_ids, params, *, batch_block=8, time_chunk=4):
    emb = params["embedding"]                                      # (V, E) f32
    E = emb.shape[1]
    B, S = x_ids.shape
    H = params["w_hh_t"].shape[0]
    C = params["w_fc_t"].shape[1]

    # ---- offline weight preparation -------------------------------------
    def permute_gates(w):   # columns [i,f,g,o] -> [i,f,o,g]
        return jnp.concatenate(
            [w[..., 0:H], w[..., H:2 * H], w[..., 3 * H:4 * H], w[..., 2 * H:3 * H]],
            axis=-1)

    w_ih = params["w_ih_t"]                                        # (2E, 4H)
    w_x = permute_gates(w_ih[:E]).astype(jnp.bfloat16)             # (E, 4H)
    w_asp = permute_gates(w_ih[E:]).astype(jnp.bfloat16)           # (E, 4H)
    w_hh = permute_gates(params["w_hh_t"]).astype(jnp.bfloat16)    # (H, 4H)
    bias = permute_gates(params["bias"]).astype(jnp.float32)       # (1, 4H)
    w_attn = params["w_attn_row"].astype(jnp.float32)              # (1, H)
    w_fc = params["w_fc_t"].astype(jnp.bfloat16)                   # (H, C)
    b_fc = params["b_fc"].astype(jnp.float32)                      # (1, C)
    # b_attn is intentionally not passed: it cancels in the softmax.

    # ---- embeddings + aspect mean (plain JAX glue) -----------------------
    x_embed = jnp.take(emb, x_ids, axis=0)                         # (B, S, E)
    aspect_embed = jnp.take(emb, aspect_ids, axis=0)               # (B, A, E)
    aspect_mean = jnp.mean(aspect_embed, axis=1)                   # (B, E)

    # ---- batch padding / blocking (sublane-full blocks, parallel axis) ---
    Bb = batch_block
    Bp = ((B + Bb - 1) // Bb) * Bb
    nb = Bp // Bb
    pad = Bp - B
    if pad:
        x_embed = jnp.pad(x_embed, ((0, pad), (0, 0), (0, 0)))
        aspect_mean = jnp.pad(aspect_mean, ((0, pad), (0, 0)))

    # ---- time chunking ----------------------------------------------------
    Tc = time_chunk if (S % time_chunk == 0) else S
    nc = S // Tc

    # time-major layout within each batch block: row t*Bb + b
    x_blocks = (x_embed.reshape(nb, Bb, S, E)
                .transpose(0, 2, 1, 3)                             # (nb,S,Bb,E)
                .reshape(nb, S * Bb, E)
                .astype(jnp.bfloat16))
    asp_blocks = aspect_mean.reshape(nb, Bb, E).astype(jnp.bfloat16)

    # ---- explicit VMEM budget (chunked streaming keeps footprint small) --
    def padded_bytes(shape, dtype):
        s = list(shape)
        s[-1] = -(-s[-1] // 128) * 128
        if len(s) >= 2:
            s[-2] = -(-s[-2] // 8) * 8
        return int(np.prod(s)) * jnp.dtype(dtype).itemsize

    in_blocks = [
        ((Tc * Bb, E), jnp.bfloat16), ((Bb, E), jnp.bfloat16),
        ((E, 4 * H), jnp.bfloat16), ((E, 4 * H), jnp.bfloat16),
        ((H, 4 * H), jnp.bfloat16), ((1, 4 * H), jnp.float32),
        ((1, H), jnp.float32), ((H, C), jnp.bfloat16), ((1, C), jnp.float32),
        ((Bb, C), jnp.float32),
    ]
    scratches = [
        ((Tc * Bb, 4 * H), jnp.float32), ((Bb, 4 * H), jnp.float32),
        ((Bb, H), jnp.float32), ((Bb, H), jnp.float32),
        ((S, Bb, H), jnp.float32),
    ]
    vmem_limit = 2 * sum(2 * padded_bytes(s, d) for s, d in in_blocks)
    vmem_limit += 2 * sum(padded_bytes(s, d) for s, d in scratches)
    vmem_limit = int(max(vmem_limit, 16 * 1024 * 1024))

    out = pl.pallas_call(
        atae_kernel,
        out_shape=jax.ShapeDtypeStruct((nb, Bb, C), jnp.float32),
        grid_spec=pltpu.PrefetchScalarGridSpec(
            num_scalar_prefetch=0,
            grid=(nb, nc),                          # (batch blocks, time chunks)
            in_specs=[
                pl.BlockSpec((None, Tc * Bb, E), lambda jb, c: (jb, c, 0)),  # x
                pl.BlockSpec((None, Bb, E), lambda jb, c: (jb, 0, 0)),       # asp
                pl.BlockSpec((E, 4 * H), lambda jb, c: (0, 0)),              # w_x
                pl.BlockSpec((E, 4 * H), lambda jb, c: (0, 0)),              # w_asp
                pl.BlockSpec((H, 4 * H), lambda jb, c: (0, 0)),              # w_hh
                pl.BlockSpec((1, 4 * H), lambda jb, c: (0, 0)),              # bias
                pl.BlockSpec((1, H), lambda jb, c: (0, 0)),                  # w_attn
                pl.BlockSpec((H, C), lambda jb, c: (0, 0)),                  # w_fc
                pl.BlockSpec((1, C), lambda jb, c: (0, 0)),                  # b_fc
            ],
            out_specs=pl.BlockSpec((None, Bb, C), lambda jb, c: (jb, 0, 0)),
            scratch_shapes=[
                pltpu.VMEM((Tc * Bb, 4 * H), jnp.float32),   # gx (per chunk)
                pltpu.VMEM((Bb, 4 * H), jnp.float32),        # gasp + bias
                pltpu.VMEM((Bb, H), jnp.float32),            # h carry
                pltpu.VMEM((Bb, H), jnp.float32),            # c carry
                pltpu.VMEM((S, Bb, H), jnp.float32),         # all h_t for attn
            ],
        ),
        compiler_params=pltpu.CompilerParams(
            dimension_semantics=("parallel", "arbitrary"),
            vmem_limit_bytes=vmem_limit),
    )(x_blocks, asp_blocks, w_x, w_asp, w_hh, bias, w_attn, w_fc, b_fc)

    return out.reshape(Bp, C)[:B]                                  # (B, C)


# ----------------------------------------------------------------------------
# Pure-JAX reference (mirrors PyTorch semantics, full f32) for verification
# ----------------------------------------------------------------------------
def atae_lstm_reference(x_ids, aspect_ids, params):
    emb = params["embedding"]
    E = emb.shape[1]
    B, S = x_ids.shape
    H = params["w_hh_t"].shape[0]

    x_embed = jnp.take(emb, x_ids, axis=0)
    aspect_embed = jnp.take(emb, aspect_ids, axis=0)
    aspect_mean = jnp.mean(aspect_embed, axis=1, keepdims=True)
    x_concat = jnp.concatenate(
        [x_embed, jnp.broadcast_to(aspect_mean, (B, S, E))], axis=2)

    w_ih_t, w_hh_t, bias = params["w_ih_t"], params["w_hh_t"], params["bias"]

    def step(carry, x_t):
        h, c = carry
        gates = x_t @ w_ih_t + h @ w_hh_t + bias
        i = jax.nn.sigmoid(gates[:, 0:H])
        f = jax.nn.sigmoid(gates[:, H:2 * H])
        g = jnp.tanh(gates[:, 2 * H:3 * H])
        o = jax.nn.sigmoid(gates[:, 3 * H:4 * H])
        c = f * c + i * g
        h = o * jnp.tanh(c)
        return (h, c), h

    h0 = jnp.zeros((B, H), jnp.float32)
    (_, _), hs = lax.scan(step, (h0, h0), jnp.swapaxes(x_concat, 0, 1))
    h_lstm = jnp.swapaxes(hs, 0, 1)                                # (B, S, H)

    logits = (h_lstm @ params["w_attn_row"].T + params["b_attn"]).squeeze(-1)
    attn = jax.nn.softmax(logits, axis=1)[..., None]
    context = jnp.sum(h_lstm * attn, axis=1)
    return context @ params["w_fc_t"] + params["b_fc"]


# ----------------------------------------------------------------------------
# Deterministic parameter construction (PyTorch-equivalent shapes, transposed)
# ----------------------------------------------------------------------------
def make_params(key, vocab_size, embed_dim, hidden_dim, num_classes):
    ks = jax.random.split(key, 8)
    E, H, C = embed_dim, hidden_dim, num_classes
    scale = 0.1
    return {
        "embedding": jax.random.normal(ks[0], (vocab_size, E), jnp.float32),
        # PyTorch LSTM: weight_ih (4H, 2E), weight_hh (4H, H) — stored transposed
        "w_ih_t": scale * jax.random.normal(ks[1], (2 * E, 4 * H), jnp.float32),
        "w_hh_t": scale * jax.random.normal(ks[2], (H, 4 * H), jnp.float32),
        "bias": scale * jax.random.normal(ks[3], (1, 4 * H), jnp.float32),
        # attention Linear(H, 1): weight kept as a (1, H) row for the lane-reduce
        "w_attn_row": scale * jax.random.normal(ks[4], (1, H), jnp.float32),
        "b_attn": scale * jax.random.normal(ks[5], (1, 1), jnp.float32),
        # fc Linear(H, C): weight (C, H) -> transposed (H, C)
        "w_fc_t": scale * jax.random.normal(ks[6], (H, C), jnp.float32),
        "b_fc": scale * jax.random.normal(ks[7], (1, C), jnp.float32),
    }


if __name__ == "__main__":
    VOCAB, EMBED, HIDDEN, CLASSES = 50, 16, 32, 3
    B, S, A = 2, 8, 4

    key = jax.random.PRNGKey(0)
    k_par, k_x, k_asp = jax.random.split(key, 3)
    params = make_params(k_par, VOCAB, EMBED, HIDDEN, CLASSES)

    x_ids = jax.random.randint(k_x, (B, S), 0, VOCAB, dtype=jnp.int32)
    aspect_ids = jax.random.randint(k_asp, (B, A), 0, VOCAB, dtype=jnp.int32)

    out = atae_lstm_forward(x_ids, aspect_ids, params,
                            batch_block=8, time_chunk=4)
    out = jax.block_until_ready(out)

    ref = jax.block_until_ready(atae_lstm_reference(x_ids, aspect_ids, params))
    # bf16 MXU operands with f32 accumulation -> relaxed tolerance vs f32 ref.
    np.testing.assert_allclose(np.asarray(out), np.asarray(ref),
                               rtol=2e-2, atol=2e-2)
    print("KERNEL_OK")
</pallas_src>

<mosaic_0001>
module attributes {stable_mosaic.version = 11 : i64} {
  func.func @atae_kernel(%arg0: i32, %arg1: i32, %arg2: memref<1x32x16xbf16, #tpu.memory_space<vmem>>, %arg3: memref<1x8x16xbf16, #tpu.memory_space<vmem>>, %arg4: memref<16x128xbf16, #tpu.memory_space<vmem>>, %arg5: memref<16x128xbf16, #tpu.memory_space<vmem>>, %arg6: memref<32x128xbf16, #tpu.memory_space<vmem>>, %arg7: memref<1x128xf32, #tpu.memory_space<vmem>>, %arg8: memref<1x32xf32, #tpu.memory_space<vmem>>, %arg9: memref<32x3xbf16, #tpu.memory_space<vmem>>, %arg10: memref<1x3xf32, #tpu.memory_space<vmem>>, %arg11: memref<1x8x3xf32, #tpu.memory_space<vmem>>, %arg12: memref<32x128xf32, #tpu.memory_space<vmem>>, %arg13: memref<8x128xf32, #tpu.memory_space<vmem>>, %arg14: memref<8x32xf32, #tpu.memory_space<vmem>>, %arg15: memref<8x32xf32, #tpu.memory_space<vmem>>, %arg16: memref<8x8x32xf32, #tpu.memory_space<vmem>>) attributes {dimension_semantics = [#tpu.dimension_semantics<parallel>, #tpu.dimension_semantics<arbitrary>], iteration_bounds = array<i64: 1, 2>, scalar_prefetch = 0 : i64, scratch_operands = 5 : i64, tpu.core_type = #tpu.core_type<tc>, window_params = [{transform_indices = @transform_0, window_bounds = array<i64: 1, 32, 16>}, {transform_indices = @transform_1, window_bounds = array<i64: 1, 8, 16>}, {pipeline_mode = #tpu.pipeline_mode<synchronous>, transform_indices = @transform_2, window_bounds = array<i64: 16, 128>}, {pipeline_mode = #tpu.pipeline_mode<synchronous>, transform_indices = @transform_3, window_bounds = array<i64: 16, 128>}, {pipeline_mode = #tpu.pipeline_mode<synchronous>, transform_indices = @transform_4, window_bounds = array<i64: 32, 128>}, {pipeline_mode = #tpu.pipeline_mode<synchronous>, transform_indices = @transform_5, window_bounds = array<i64: 1, 128>}, {pipeline_mode = #tpu.pipeline_mode<synchronous>, transform_indices = @transform_6, window_bounds = array<i64: 1, 32>}, {pipeline_mode = #tpu.pipeline_mode<synchronous>, transform_indices = @transform_7, window_bounds = array<i64: 32, 3>}, {pipeline_mode = #tpu.pipeline_mode<synchronous>, transform_indices = @transform_8, window_bounds = array<i64: 1, 3>}, {transform_indices = @transform_9, window_bounds = array<i64: 1, 8, 3>}]} {
    %c0_i32 = arith.constant 0 : i32
    %0 = arith.cmpi eq, %arg1, %c0_i32 : i32
    %1 = arith.extui %0 : i1 to i32
    %c0_i32_0 = arith.constant 0 : i32
    %2 = arith.cmpi ne, %1, %c0_i32_0 : i32
    scf.if %2 {
      %cst_46 = arith.constant 0.000000e+00 : f32
      %125 = vector.broadcast %cst_46 : f32 to vector<8x32xf32>
      %c0_47 = arith.constant 0 : index
      %c0_48 = arith.constant 0 : index
      %126 = vector.load %arg14[%c0_47, %c0_48] : memref<8x32xf32, #tpu.memory_space<vmem>>, vector<8x32xf32>
      tpu.vector_store %arg14[%c0_47, %c0_48], %125 {strides = array<i32>} : memref<8x32xf32, #tpu.memory_space<vmem>>, vector<8x32xf32>,
      %cst_49 = arith.constant 0.000000e+00 : f32
      %127 = vector.broadcast %cst_49 : f32 to vector<8x32xf32>
      %c0_50 = arith.constant 0 : index
      %c0_51 = arith.constant 0 : index
      %128 = vector.load %arg15[%c0_50, %c0_51] : memref<8x32xf32, #tpu.memory_space<vmem>>, vector<8x32xf32>
      tpu.vector_store %arg15[%c0_50, %c0_51], %127 {strides = array<i32>} : memref<8x32xf32, #tpu.memory_space<vmem>>, vector<8x32xf32>,
      %c0_52 = arith.constant 0 : index
      %c0_53 = arith.constant 0 : index
      %c0_54 = arith.constant 0 : index
      %129 = vector.load %arg3[%c0_52, %c0_53, %c0_54] : memref<1x8x16xbf16, #tpu.memory_space<vmem>>, vector<1x8x16xbf16>
      %130 = vector.shape_cast %129 : vector<1x8x16xbf16> to vector<8x16xbf16>
      %c0_55 = arith.constant 0 : index
      %c0_56 = arith.constant 0 : index
      %131 = vector.load %arg5[%c0_55, %c0_56] : memref<16x128xbf16, #tpu.memory_space<vmem>>, vector<16x128xbf16>
      %cst_57 = arith.constant dense<0.000000e+00> : vector<8x128xf32>
      %132 = tpu.matmul %130, %131, %cst_57 {dimension_numbers = #tpu.dot_dimension_numbers<[1], [0], [0], [1], [0, 0, 1, 1], [], []>} : vector<8x16xbf16>, vector<16x128xbf16>, vector<8x128xf32> -> vector<8x128xf32>
      %c0_58 = arith.constant 0 : index
      %c0_59 = arith.constant 0 : index
      %133 = vector.load %arg7[%c0_58, %c0_59] : memref<1x128xf32, #tpu.memory_space<vmem>>, vector<1x128xf32>
      %134 = vector.broadcast %133 : vector<1x128xf32> to vector<8x128xf32>
      %135 = arith.addf %132, %134 : vector<8x128xf32>
      %c0_60 = arith.constant 0 : index
      %c0_61 = arith.constant 0 : index
      %136 = vector.load %arg13[%c0_60, %c0_61] : memref<8x128xf32, #tpu.memory_space<vmem>>, vector<8x128xf32>
      tpu.vector_store %arg13[%c0_60, %c0_61], %135 {strides = array<i32>} : memref<8x128xf32, #tpu.memory_space<vmem>>, vector<8x128xf32>,
    } else {
    }
    %c0 = arith.constant 0 : index
    %c0_1 = arith.constant 0 : index
    %c0_2 = arith.constant 0 : index
    %3 = vector.load %arg2[%c0, %c0_1, %c0_2] : memref<1x32x16xbf16, #tpu.memory_space<vmem>>, vector<1x32x16xbf16>
    %4 = vector.shape_cast %3 : vector<1x32x16xbf16> to vector<32x16xbf16>
    %c0_3 = arith.constant 0 : index
    %c0_4 = arith.constant 0 : index
    %5 = vector.load %arg4[%c0_3, %c0_4] : memref<16x128xbf16, #tpu.memory_space<vmem>>, vector<16x128xbf16>
    %cst = arith.constant dense<0.000000e+00> : vector<32x128xf32>
    %6 = tpu.matmul %4, %5, %cst {dimension_numbers = #tpu.dot_dimension_numbers<[1], [0], [0], [1], [0, 0, 1, 1], [], []>} : vector<32x16xbf16>, vector<16x128xbf16>, vector<32x128xf32> -> vector<32x128xf32>
    %c0_5 = arith.constant 0 : index
    %c0_6 = arith.constant 0 : index
    %7 = vector.load %arg12[%c0_5, %c0_6] : memref<32x128xf32, #tpu.memory_space<vmem>>, vector<32x128xf32>
    tpu.vector_store %arg12[%c0_5, %c0_6], %6 {strides = array<i32>} : memref<32x128xf32, #tpu.memory_space<vmem>>, vector<32x128xf32>,
    %c0_7 = arith.constant 0 : index
    %c0_8 = arith.constant 0 : index
    %8 = vector.load %arg6[%c0_7, %c0_8] : memref<32x128xbf16, #tpu.memory_space<vmem>>, vector<32x128xbf16>
    %c0_9 = arith.constant 0 : index
    %c0_10 = arith.constant 0 : index
    %9 = vector.load %arg13[%c0_9, %c0_10] : memref<8x128xf32, #tpu.memory_space<vmem>>, vector<8x128xf32>
    %c0_11 = arith.constant 0 : index
    %c0_12 = arith.constant 0 : index
    %10 = vector.load %arg14[%c0_11, %c0_12] : memref<8x32xf32, #tpu.memory_space<vmem>>, vector<8x32xf32>
    %c0_13 = arith.constant 0 : index
    %c0_14 = arith.constant 0 : index
    %11 = vector.load %arg15[%c0_13, %c0_14] : memref<8x32xf32, #tpu.memory_space<vmem>>, vector<8x32xf32>
    %c0_15 = arith.constant 0 : index
    %c0_16 = arith.constant 0 : index
    %12 = vector.load %arg12[%c0_15, %c0_16] : memref<32x128xf32, #tpu.memory_space<vmem>>, vector<8x128xf32>
    %13 = arith.addf %12, %9 : vector<8x128xf32>
    %14 = arith.truncf %10 : vector<8x32xf32> to vector<8x32xbf16>
    %cst_17 = arith.constant dense<0.000000e+00> : vector<8x128xf32>
    %15 = tpu.matmul %14, %8, %cst_17 {dimension_numbers = #tpu.dot_dimension_numbers<[1], [0], [0], [1], [0, 0, 1, 1], [], []>} : vector<8x32xbf16>, vector<32x128xbf16>, vector<8x128xf32> -> vector<8x128xf32>
    %16 = arith.addf %13, %15 : vector<8x128xf32>
    %17 = vector.extract_strided_slice %16 {offsets = [0, 0], sizes = [8, 96], strides = [1, 1]} : vector<8x128xf32> to vector<8x96xf32>
    %18 = arith.negf %17 : vector<8x96xf32>
    %19 = math.exp %18 : vector<8x96xf32>
    %cst_18 = arith.constant 1.000000e+00 : f32
    %20 = vector.broadcast %cst_18 : f32 to vector<8x96xf32>
    %21 = arith.addf %20, %19 : vector<8x96xf32>
    %22 = arith.divf %20, %21 : vector<8x96xf32>
    %23 = vector.extract_strided_slice %16 {offsets = [0, 96], sizes = [8, 32], strides = [1, 1]} : vector<8x128xf32> to vector<8x32xf32>
    %24 = math.tanh %23 : vector<8x32xf32>
    %25 = vector.extract_strided_slice %22 {offsets = [0, 0], sizes = [8, 32], strides = [1, 1]} : vector<8x96xf32> to vector<8x32xf32>
    %26 = vector.extract_strided_slice %22 {offsets = [0, 32], sizes = [8, 32], strides = [1, 1]} : vector<8x96xf32> to vector<8x32xf32>
    %27 = vector.extract_strided_slice %22 {offsets = [0, 64], sizes = [8, 32], strides = [1, 1]} : vector<8x96xf32> to vector<8x32xf32>
    %28 = arith.mulf %26, %11 : vector<8x32xf32>
    %29 = arith.mulf %25, %24 : vector<8x32xf32>
    %30 = arith.addf %28, %29 : vector<8x32xf32>
    %31 = math.tanh %30 : vector<8x32xf32>
    %32 = arith.mulf %27, %31 : vector<8x32xf32>
    %c4_i32 = arith.constant 4 : i32
    %33 = arith.muli %arg1, %c4_i32 : i32
    %c0_i32_19 = arith.constant 0 : i32
    %34 = arith.addi %33, %c0_i32_19 : i32
    %35 = arith.index_cast %34 : i32 to index
    %c0_20 = arith.constant 0 : index
    %c0_21 = arith.constant 0 : index
    %36 = vector.load %arg16[%35, %c0_20, %c0_21] : memref<8x8x32xf32, #tpu.memory_space<vmem>>, vector<1x8x32xf32>
    %37 = vector.shape_cast %36 : vector<1x8x32xf32> to vector<8x32xf32>
    %38 = vector.shape_cast %32 : vector<8x32xf32> to vector<1x8x32xf32>
    tpu.vector_store %arg16[%35, %c0_20, %c0_21], %38 {strides = array<i32>} : memref<8x8x32xf32, #tpu.memory_space<vmem>>, vector<1x8x32xf32>,
    %c8 = arith.constant 8 : index
    %c0_22 = arith.constant 0 : index
    %39 = vector.load %arg12[%c8, %c0_22] : memref<32x128xf32, #tpu.memory_space<vmem>>, vector<8x128xf32>
    %40 = arith.addf %39, %9 : vector<8x128xf32>
    %41 = arith.truncf %32 : vector<8x32xf32> to vector<8x32xbf16>
    %cst_23 = arith.constant dense<0.000000e+00> : vector<8x128xf32>
    %42 = tpu.matmul %41, %8, %cst_23 {dimension_numbers = #tpu.dot_dimension_numbers<[1], [0], [0], [1], [0, 0, 1, 1], [], []>} : vector<8x32xbf16>, vector<32x128xbf16>, vector<8x128xf32> -> vector<8x128xf32>
    %43 = arith.addf %40, %42 : vector<8x128xf32>
    %44 = vector.extract_strided_slice %43 {offsets = [0, 0], sizes = [8, 96], strides = [1, 1]} : vector<8x128xf32> to vector<8x96xf32>
    %45 = arith.negf %44 : vector<8x96xf32>
    %46 = math.exp %45 : vector<8x96xf32>
    %cst_24 = arith.constant 1.000000e+00 : f32
    %47 = vector.broadcast %cst_24 : f32 to vector<8x96xf32>
    %48 = arith.addf %47, %46 : vector<8x96xf32>
    %49 = arith.divf %47, %48 : vector<8x96xf32>
    %50 = vector.extract_strided_slice %43 {offsets = [0, 96], sizes = [8, 32], strides = [1, 1]} : vector<8x128xf32> to vector<8x32xf32>
    %51 = math.tanh %50 : vector<8x32xf32>
    %52 = vector.extract_strided_slice %49 {offsets = [0, 0], sizes = [8, 32], strides = [1, 1]} : vector<8x96xf32> to vector<8x32xf32>
    %53 = vector.extract_strided_slice %49 {offsets = [0, 32], sizes = [8, 32], strides = [1, 1]} : vector<8x96xf32> to vector<8x32xf32>
    %54 = vector.extract_strided_slice %49 {offsets = [0, 64], sizes = [8, 32], strides = [1, 1]} : vector<8x96xf32> to vector<8x32xf32>
    %55 = arith.mulf %53, %30 : vector<8x32xf32>
    %56 = arith.mulf %52, %51 : vector<8x32xf32>
    %57 = arith.addf %55, %56 : vector<8x32xf32>
    %58 = math.tanh %57 : vector<8x32xf32>
    %59 = arith.mulf %54, %58 : vector<8x32xf32>
    %c4_i32_25 = arith.constant 4 : i32
    %60 = arith.muli %arg1, %c4_i32_25 : i32
    %c1_i32 = arith.constant 1 : i32
    %61 = arith.addi %60, %c1_i32 : i32
    %62 = arith.index_cast %61 : i32 to index
    %c0_26 = arith.constant 0 : index
    %c0_27 = arith.constant 0 : index
    %63 = vector.load %arg16[%62, %c0_26, %c0_27] : memref<8x8x32xf32, #tpu.memory_space<vmem>>, vector<1x8x32xf32>
    %64 = vector.shape_cast %63 : vector<1x8x32xf32> to vector<8x32xf32>
    %65 = vector.shape_cast %59 : vector<8x32xf32> to vector<1x8x32xf32>
    tpu.vector_store %arg16[%62, %c0_26, %c0_27], %65 {strides = array<i32>} : memref<8x8x32xf32, #tpu.memory_space<vmem>>, vector<1x8x32xf32>,
    %c16 = arith.constant 16 : index
    %c0_28 = arith.constant 0 : index
    %66 = vector.load %arg12[%c16, %c0_28] : memref<32x128xf32, #tpu.memory_space<vmem>>, vector<8x128xf32>
    %67 = arith.addf %66, %9 : vector<8x128xf32>
    %68 = arith.truncf %59 : vector<8x32xf32> to vector<8x32xbf16>
    %cst_29 = arith.constant dense<0.000000e+00> : vector<8x128xf32>
    %69 = tpu.matmul %68, %8, %cst_29 {dimension_numbers = #tpu.dot_dimension_numbers<[1], [0], [0], [1], [0, 0, 1, 1], [], []>} : vector<8x32xbf16>, vector<32x128xbf16>, vector<8x128xf32> -> vector<8x128xf32>
    %70 = arith.addf %67, %69 : vector<8x128xf32>
    %71 = vector.extract_strided_slice %70 {offsets = [0, 0], sizes = [8, 96], strides = [1, 1]} : vector<8x128xf32> to vector<8x96xf32>
    %72 = arith.negf %71 : vector<8x96xf32>
    %73 = math.exp %72 : vector<8x96xf32>
    %cst_30 = arith.constant 1.000000e+00 : f32
    %74 = vector.broadcast %cst_30 : f32 to vector<8x96xf32>
    %75 = arith.addf %74, %73 : vector<8x96xf32>
    %76 = arith.divf %74, %75 : vector<8x96xf32>
    %77 = vector.extract_strided_slice %70 {offsets = [0, 96], sizes = [8, 32], strides = [1, 1]} : vector<8x128xf32> to vector<8x32xf32>
    %78 = math.tanh %77 : vector<8x32xf32>
    %79 = vector.extract_strided_slice %76 {offsets = [0, 0], sizes = [8, 32], strides = [1, 1]} : vector<8x96xf32> to vector<8x32xf32>
    %80 = vector.extract_strided_slice %76 {offsets = [0, 32], sizes = [8, 32], strides = [1, 1]} : vector<8x96xf32> to vector<8x32xf32>
    %81 = vector.extract_strided_slice %76 {offsets = [0, 64], sizes = [8, 32], strides = [1, 1]} : vector<8x96xf32> to vector<8x32xf32>
    %82 = arith.mulf %80, %57 : vector<8x32xf32>
    %83 = arith.mulf %79, %78 : vector<8x32xf32>
    %84 = arith.addf %82, %83 : vector<8x32xf32>
    %85 = math.tanh %84 : vector<8x32xf32>
    %86 = arith.mulf %81, %85 : vector<8x32xf32>
    %c4_i32_31 = arith.constant 4 : i32
    %87 = arith.muli %arg1, %c4_i32_31 : i32
    %c2_i32 = arith.constant 2 : i32
    %88 = arith.addi %87, %c2_i32 : i32
    %89 = arith.index_cast %88 : i32 to index
    %c0_32 = arith.constant 0 : index
    %c0_33 = arith.constant 0 : index
    %90 = vector.load %arg16[%89, %c0_32, %c0_33] : memref<8x8x32xf32, #tpu.memory_space<vmem>>, vector<1x8x32xf32>
    %91 = vector.shape_cast %90 : vector<1x8x32xf32> to vector<8x32xf32>
    %92 = vector.shape_cast %86 : vector<8x32xf32> to vector<1x8x32xf32>
    tpu.vector_store %arg16[%89, %c0_32, %c0_33], %92 {strides = array<i32>} : memref<8x8x32xf32, #tpu.memory_space<vmem>>, vector<1x8x32xf32>,
    %c24 = arith.constant 24 : index
    %c0_34 = arith.constant 0 : index
    %93 = vector.load %arg12[%c24, %c0_34] : memref<32x128xf32, #tpu.memory_space<vmem>>, vector<8x128xf32>
    %94 = arith.addf %93, %9 : vector<8x128xf32>
    %95 = arith.truncf %86 : vector<8x32xf32> to vector<8x32xbf16>
    %cst_35 = arith.constant dense<0.000000e+00> : vector<8x128xf32>
    %96 = tpu.matmul %95, %8, %cst_35 {dimension_numbers = #tpu.dot_dimension_numbers<[1], [0], [0], [1], [0, 0, 1, 1], [], []>} : vector<8x32xbf16>, vector<32x128xbf16>, vector<8x128xf32> -> vector<8x128xf32>
    %97 = arith.addf %94, %96 : vector<8x128xf32>
    %98 = vector.extract_strided_slice %97 {offsets = [0, 0], sizes = [8, 96], strides = [1, 1]} : vector<8x128xf32> to vector<8x96xf32>
    %99 = arith.negf %98 : vector<8x96xf32>
    %100 = math.exp %99 : vector<8x96xf32>
    %cst_36 = arith.constant 1.000000e+00 : f32
    %101 = vector.broadcast %cst_36 : f32 to vector<8x96xf32>
    %102 = arith.addf %101, %100 : vector<8x96xf32>
    %103 = arith.divf %101, %102 : vector<8x96xf32>
    %104 = vector.extract_strided_slice %97 {offsets = [0, 96], sizes = [8, 32], strides = [1, 1]} : vector<8x128xf32> to vector<8x32xf32>
    %105 = math.tanh %104 : vector<8x32xf32>
    %106 = vector.extract_strided_slice %103 {offsets = [0, 0], sizes = [8, 32], strides = [1, 1]} : vector<8x96xf32> to vector<8x32xf32>
    %107 = vector.extract_strided_slice %103 {offsets = [0, 32], sizes = [8, 32], strides = [1, 1]} : vector<8x96xf32> to vector<8x32xf32>
    %108 = vector.extract_strided_slice %103 {offsets = [0, 64], sizes = [8, 32], strides = [1, 1]} : vector<8x96xf32> to vector<8x32xf32>
    %109 = arith.mulf %107, %84 : vector<8x32xf32>
    %110 = arith.mulf %106, %105 : vector<8x32xf32>
    %111 = arith.addf %109, %110 : vector<8x32xf32>
    %112 = math.tanh %111 : vector<8x32xf32>
    %113 = arith.mulf %108, %112 : vector<8x32xf32>
    %c4_i32_37 = arith.constant 4 : i32
    %114 = arith.muli %arg1, %c4_i32_37 : i32
    %c3_i32 = arith.constant 3 : i32
    %115 = arith.addi %114, %c3_i32 : i32
    %116 = arith.index_cast %115 : i32 to index
    %c0_38 = arith.constant 0 : index
    %c0_39 = arith.constant 0 : index
    %117 = vector.load %arg16[%116, %c0_38, %c0_39] : memref<8x8x32xf32, #tpu.memory_space<vmem>>, vector<1x8x32xf32>
    %118 = vector.shape_cast %117 : vector<1x8x32xf32> to vector<8x32xf32>
    %119 = vector.shape_cast %113 : vector<8x32xf32> to vector<1x8x32xf32>
    tpu.vector_store %arg16[%116, %c0_38, %c0_39], %119 {strides = array<i32>} : memref<8x8x32xf32, #tpu.memory_space<vmem>>, vector<1x8x32xf32>,
    %c0_40 = arith.constant 0 : index
    %c0_41 = arith.constant 0 : index
    %120 = vector.load %arg14[%c0_40, %c0_41] : memref<8x32xf32, #tpu.memory_space<vmem>>, vector<8x32xf32>
    tpu.vector_store %arg14[%c0_40, %c0_41], %113 {strides = array<i32>} : memref<8x32xf32, #tpu.memory_space<vmem>>, vector<8x32xf32>,
    %c0_42 = arith.constant 0 : index
    %c0_43 = arith.constant 0 : index
    %121 = vector.load %arg15[%c0_42, %c0_43] : memref<8x32xf32, #tpu.memory_space<vmem>>, vector<8x32xf32>
    tpu.vector_store %arg15[%c0_42, %c0_43], %111 {strides = array<i32>} : memref<8x32xf32, #tpu.memory_space<vmem>>, vector<8x32xf32>,
    %c1_i32_44 = arith.constant 1 : i32
    %122 = arith.cmpi eq, %arg1, %c1_i32_44 : i32
    %123 = arith.extui %122 : i1 to i32
    %c0_i32_45 = arith.constant 0 : i32
    %124 = arith.cmpi ne, %123, %c0_i32_45 : i32
    scf.if %124 {
      %c0_46 = arith.constant 0 : index
      %c0_47 = arith.constant 0 : index
      %125 = vector.load %arg8[%c0_46, %c0_47] : memref<1x32xf32, #tpu.memory_space<vmem>>, vector<1x32xf32>
      %cst_48 = arith.constant 0xFF800000 : f32
      %126 = vector.broadcast %cst_48 : f32 to vector<8x1xf32>
      %c0_49 = arith.constant 0 : index
      %c0_50 = arith.constant 0 : index
      %c0_51 = arith.constant 0 : index
      %127 = vector.load %arg16[%c0_49, %c0_50, %c0_51] : memref<8x8x32xf32, #tpu.memory_space<vmem>>, vector<1x8x32xf32>
      %128 = vector.shape_cast %127 : vector<1x8x32xf32> to vector<8x32xf32>
      %129 = vector.broadcast %125 : vector<1x32xf32> to vector<8x32xf32>
      %130 = arith.mulf %128, %129 : vector<8x32xf32>
      %cst_52 = arith.constant dense<0.000000e+00> : vector<8xf32>
      %131 = vector.multi_reduction <add>, %130, %cst_52 [1] : vector<8x32xf32> to vector<8xf32>
      %132 = vector.shape_cast %131 : vector<8xf32> to vector<8x1xf32>
      %133 = arith.maximumf %126, %132 : vector<8x1xf32>
      %c1 = arith.constant 1 : index
      %c0_53 = arith.constant 0 : index
      %c0_54 = arith.constant 0 : index
      %134 = vector.load %arg16[%c1, %c0_53, %c0_54] : memref<8x8x32xf32, #tpu.memory_space<vmem>>, vector<1x8x32xf32>
      %135 = vector.shape_cast %134 : vector<1x8x32xf32> to vector<8x32xf32>
      %136 = vector.broadcast %125 : vector<1x32xf32> to vector<8x32xf32>
      %137 = arith.mulf %135, %136 : vector<8x32xf32>
      %cst_55 = arith.constant dense<0.000000e+00> : vector<8xf32>
      %138 = vector.multi_reduction <add>, %137, %cst_55 [1] : vector<8x32xf32> to vector<8xf32>
      %139 = vector.shape_cast %138 : vector<8xf32> to vector<8x1xf32>
      %140 = arith.maximumf %133, %139 : vector<8x1xf32>
      %c2 = arith.constant 2 : index
      %c0_56 = arith.constant 0 : index
      %c0_57 = arith.constant 0 : index
      %141 = vector.load %arg16[%c2, %c0_56, %c0_57] : memref<8x8x32xf32, #tpu.memory_space<vmem>>, vector<1x8x32xf32>
      %142 = vector.shape_cast %141 : vector<1x8x32xf32> to vector<8x32xf32>
      %143 = vector.broadcast %125 : vector<1x32xf32> to vector<8x32xf32>
      %144 = arith.mulf %142, %143 : vector<8x32xf32>
      %cst_58 = arith.constant dense<0.000000e+00> : vector<8xf32>
      %145 = vector.multi_reduction <add>, %144, %cst_58 [1] : vector<8x32xf32> to vector<8xf32>
      %146 = vector.shape_cast %145 : vector<8xf32> to vector<8x1xf32>
      %147 = arith.maximumf %140, %146 : vector<8x1xf32>
      %c3 = arith.constant 3 : index
      %c0_59 = arith.constant 0 : index
      %c0_60 = arith.constant 0 : index
      %148 = vector.load %arg16[%c3, %c0_59, %c0_60] : memref<8x8x32xf32, #tpu.memory_space<vmem>>, vector<1x8x32xf32>
      %149 = vector.shape_cast %148 : vector<1x8x32xf32> to vector<8x32xf32>
      %150 = vector.broadcast %125 : vector<1x32xf32> to vector<8x32xf32>
      %151 = arith.mulf %149, %150 : vector<8x32xf32>
      %cst_61 = arith.constant dense<0.000000e+00> : vector<8xf32>
      %152 = vector.multi_reduction <add>, %151, %cst_61 [1] : vector<8x32xf32> to vector<8xf32>
      %153 = vector.shape_cast %152 : vector<8xf32> to vector<8x1xf32>
      %154 = arith.maximumf %147, %153 : vector<8x1xf32>
      %c4 = arith.constant 4 : index
      %c0_62 = arith.constant 0 : index
      %c0_63 = arith.constant 0 : index
      %155 = vector.load %arg16[%c4, %c0_62, %c0_63] : memref<8x8x32xf32, #tpu.memory_space<vmem>>, vector<1x8x32xf32>
      %156 = vector.shape_cast %155 : vector<1x8x32xf32> to vector<8x32xf32>
      %157 = vector.broadcast %125 : vector<1x32xf32> to vector<8x32xf32>
      %158 = arith.mulf %156, %157 : vector<8x32xf32>
      %cst_64 = arith.constant dense<0.000000e+00> : vector<8xf32>
      %159 = vector.multi_reduction <add>, %158, %cst_64 [1] : vector<8x32xf32> to vector<8xf32>
      %160 = vector.shape_cast %159 : vector<8xf32> to vector<8x1xf32>
      %161 = arith.maximumf %154, %160 : vector<8x1xf32>
      %c5 = arith.constant 5 : index
      %c0_65 = arith.constant 0 : index
      %c0_66 = arith.constant 0 : index
      %162 = vector.load %arg16[%c5, %c0_65, %c0_66] : memref<8x8x32xf32, #tpu.memory_space<vmem>>, vector<1x8x32xf32>
      %163 = vector.shape_cast %162 : vector<1x8x32xf32> to vector<8x32xf32>
      %164 = vector.broadcast %125 : vector<1x32xf32> to vector<8x32xf32>
      %165 = arith.mulf %163, %164 : vector<8x32xf32>
      %cst_67 = arith.constant dense<0.000000e+00> : vector<8xf32>
      %166 = vector.multi_reduction <add>, %165, %cst_67 [1] : vector<8x32xf32> to vector<8xf32>
      %167 = vector.shape_cast %166 : vector<8xf32> to vector<8x1xf32>
      %168 = arith.maximumf %161, %167 : vector<8x1xf32>
      %c6 = arith.constant 6 : index
      %c0_68 = arith.constant 0 : index
      %c0_69 = arith.constant 0 : index
      %169 = vector.load %arg16[%c6, %c0_68, %c0_69] : memref<8x8x32xf32, #tpu.memory_space<vmem>>, vector<1x8x32xf32>
      %170 = vector.shape_cast %169 : vector<1x8x32xf32> to vector<8x32xf32>
      %171 = vector.broadcast %125 : vector<1x32xf32> to vector<8x32xf32>
      %172 = arith.mulf %170, %171 : vector<8x32xf32>
      %cst_70 = arith.constant dense<0.000000e+00> : vector<8xf32>
      %173 = vector.multi_reduction <add>, %172, %cst_70 [1] : vector<8x32xf32> to vector<8xf32>
      %174 = vector.shape_cast %173 : vector<8xf32> to vector<8x1xf32>
      %175 = arith.maximumf %168, %174 : vector<8x1xf32>
      %c7 = arith.constant 7 : index
      %c0_71 = arith.constant 0 : index
      %c0_72 = arith.constant 0 : index
      %176 = vector.load %arg16[%c7, %c0_71, %c0_72] : memref<8x8x32xf32, #tpu.memory_space<vmem>>, vector<1x8x32xf32>
      %177 = vector.shape_cast %176 : vector<1x8x32xf32> to vector<8x32xf32>
      %178 = vector.broadcast %125 : vector<1x32xf32> to vector<8x32xf32>
      %179 = arith.mulf %177, %178 : vector<8x32xf32>
      %cst_73 = arith.constant dense<0.000000e+00> : vector<8xf32>
      %180 = vector.multi_reduction <add>, %179, %cst_73 [1] : vector<8x32xf32> to vector<8xf32>
      %181 = vector.shape_cast %180 : vector<8xf32> to vector<8x1xf32>
      %182 = arith.maximumf %175, %181 : vector<8x1xf32>
      %cst_74 = arith.constant 0.000000e+00 : f32
      %183 = vector.broadcast %cst_74 : f32 to vector<8x1xf32>
      %cst_75 = arith.constant 0.000000e+00 : f32
      %184 = vector.broadcast %cst_75 : f32 to vector<8x32xf32>
      %185 = arith.subf %132, %182 : vector<8x1xf32>
      %186 = math.exp %185 : vector<8x1xf32>
      %187 = arith.addf %183, %186 : vector<8x1xf32>
      %c0_76 = arith.constant 0 : index
      %c0_77 = arith.constant 0 : index
      %c0_78 = arith.constant 0 : index
      %188 = vector.load %arg16[%c0_76, %c0_77, %c0_78] : memref<8x8x32xf32, #tpu.memory_space<vmem>>, vector<1x8x32xf32>
      %189 = vector.shape_cast %188 : vector<1x8x32xf32> to vector<8x32xf32>
      %190 = vector.broadcast %186 : vector<8x1xf32> to vector<8x32xf32>
      %191 = arith.mulf %190, %189 : vector<8x32xf32>
      %192 = arith.addf %184, %191 : vector<8x32xf32>
      %193 = arith.subf %139, %182 : vector<8x1xf32>
      %194 = math.exp %193 : vector<8x1xf32>
      %195 = arith.addf %187, %194 : vector<8x1xf32>
      %c1_79 = arith.constant 1 : index
      %c0_80 = arith.constant 0 : index
      %c0_81 = arith.constant 0 : index
      %196 = vector.load %arg16[%c1_79, %c0_80, %c0_81] : memref<8x8x32xf32, #tpu.memory_space<vmem>>, vector<1x8x32xf32>
      %197 = vector.shape_cast %196 : vector<1x8x32xf32> to vector<8x32xf32>
      %198 = vector.broadcast %194 : vector<8x1xf32> to vector<8x32xf32>
      %199 = arith.mulf %198, %197 : vector<8x32xf32>
      %200 = arith.addf %192, %199 : vector<8x32xf32>
      %201 = arith.subf %146, %182 : vector<8x1xf32>
      %202 = math.exp %201 : vector<8x1xf32>
      %203 = arith.addf %195, %202 : vector<8x1xf32>
      %c2_82 = arith.constant 2 : index
      %c0_83 = arith.constant 0 : index
      %c0_84 = arith.constant 0 : index
      %204 = vector.load %arg16[%c2_82, %c0_83, %c0_84] : memref<8x8x32xf32, #tpu.memory_space<vmem>>, vector<1x8x32xf32>
      %205 = vector.shape_cast %204 : vector<1x8x32xf32> to vector<8x32xf32>
      %206 = vector.broadcast %202 : vector<8x1xf32> to vector<8x32xf32>
      %207 = arith.mulf %206, %205 : vector<8x32xf32>
      %208 = arith.addf %200, %207 : vector<8x32xf32>
      %209 = arith.subf %153, %182 : vector<8x1xf32>
      %210 = math.exp %209 : vector<8x1xf32>
      %211 = arith.addf %203, %210 : vector<8x1xf32>
      %c3_85 = arith.constant 3 : index
      %c0_86 = arith.constant 0 : index
      %c0_87 = arith.constant 0 : index
      %212 = vector.load %arg16[%c3_85, %c0_86, %c0_87] : memref<8x8x32xf32, #tpu.memory_space<vmem>>, vector<1x8x32xf32>
      %213 = vector.shape_cast %212 : vector<1x8x32xf32> to vector<8x32xf32>
      %214 = vector.broadcast %210 : vector<8x1xf32> to vector<8x32xf32>
      %215 = arith.mulf %214, %213 : vector<8x32xf32>
      %216 = arith.addf %208, %215 : vector<8x32xf32>
      %217 = arith.subf %160, %182 : vector<8x1xf32>
      %218 = math.exp %217 : vector<8x1xf32>
      %219 = arith.addf %211, %218 : vector<8x1xf32>
      %c4_88 = arith.constant 4 : index
      %c0_89 = arith.constant 0 : index
      %c0_90 = arith.constant 0 : index
      %220 = vector.load %arg16[%c4_88, %c0_89, %c0_90] : memref<8x8x32xf32, #tpu.memory_space<vmem>>, vector<1x8x32xf32>
      %221 = vector.shape_cast %220 : vector<1x8x32xf32> to vector<8x32xf32>
      %222 = vector.broadcast %218 : vector<8x1xf32> to vector<8x32xf32>
      %223 = arith.mulf %222, %221 : vector<8x32xf32>
      %224 = arith.addf %216, %223 : vector<8x32xf32>
      %225 = arith.subf %167, %182 : vector<8x1xf32>
      %226 = math.exp %225 : vector<8x1xf32>
      %227 = arith.addf %219, %226 : vector<8x1xf32>
      %c5_91 = arith.constant 5 : index
      %c0_92 = arith.constant 0 : index
      %c0_93 = arith.constant 0 : index
      %228 = vector.load %arg16[%c5_91, %c0_92, %c0_93] : memref<8x8x32xf32, #tpu.memory_space<vmem>>, vector<1x8x32xf32>
      %229 = vector.shape_cast %228 : vector<1x8x32xf32> to vector<8x32xf32>
      %230 = vector.broadcast %226 : vector<8x1xf32> to vector<8x32xf32>
      %231 = arith.mulf %230, %229 : vector<8x32xf32>
      %232 = arith.addf %224, %231 : vector<8x32xf32>
      %233 = arith.subf %174, %182 : vector<8x1xf32>
      %234 = math.exp %233 : vector<8x1xf32>
      %235 = arith.addf %227, %234 : vector<8x1xf32>
      %c6_94 = arith.constant 6 : index
      %c0_95 = arith.constant 0 : index
      %c0_96 = arith.constant 0 : index
      %236 = vector.load %arg16[%c6_94, %c0_95, %c0_96] : memref<8x8x32xf32, #tpu.memory_space<vmem>>, vector<1x8x32xf32>
      %237 = vector.shape_cast %236 : vector<1x8x32xf32> to vector<8x32xf32>
      %238 = vector.broadcast %234 : vector<8x1xf32> to vector<8x32xf32>
      %239 = arith.mulf %238, %237 : vector<8x32xf32>
      %240 = arith.addf %232, %239 : vector<8x32xf32>
      %241 = arith.subf %181, %182 : vector<8x1xf32>
      %242 = math.exp %241 : vector<8x1xf32>
      %243 = arith.addf %235, %242 : vector<8x1xf32>
      %c7_97 = arith.constant 7 : index
      %c0_98 = arith.constant 0 : index
      %c0_99 = arith.constant 0 : index
      %244 = vector.load %arg16[%c7_97, %c0_98, %c0_99] : memref<8x8x32xf32, #tpu.memory_space<vmem>>, vector<1x8x32xf32>
      %245 = vector.shape_cast %244 : vector<1x8x32xf32> to vector<8x32xf32>
      %246 = vector.broadcast %242 : vector<8x1xf32> to vector<8x32xf32>
      %247 = arith.mulf %246, %245 : vector<8x32xf32>
      %248 = arith.addf %240, %247 : vector<8x32xf32>
      %249 = vector.broadcast %243 : vector<8x1xf32> to vector<8x32xf32>
      %250 = arith.divf %248, %249 : vector<8x32xf32>
      %251 = arith.truncf %250 : vector<8x32xf32> to vector<8x32xbf16>
      %c0_100 = arith.constant 0 : index
      %c0_101 = arith.constant 0 : index
      %252 = vector.load %arg9[%c0_100, %c0_101] : memref<32x3xbf16, #tpu.memory_space<vmem>>, vector<32x3xbf16>
      %cst_102 = arith.constant dense<0.000000e+00> : vector<8x3xf32>
      %253 = tpu.matmul %251, %252, %cst_102 {dimension_numbers = #tpu.dot_dimension_numbers<[1], [0], [0], [1], [0, 0, 1, 1], [], []>} : vector<8x32xbf16>, vector<32x3xbf16>, vector<8x3xf32> -> vector<8x3xf32>
      %c0_103 = arith.constant 0 : index
      %c0_104 = arith.constant 0 : index
      %254 = vector.load %arg10[%c0_103, %c0_104] : memref<1x3xf32, #tpu.memory_space<vmem>>, vector<1x3xf32>
      %255 = vector.broadcast %254 : vector<1x3xf32> to vector<8x3xf32>
      %256 = arith.addf %253, %255 : vector<8x3xf32>
      %c0_105 = arith.constant 0 : index
      %c0_106 = arith.constant 0 : index
      %c0_107 = arith.constant 0 : index
      %257 = vector.load %arg11[%c0_105, %c0_106, %c0_107] : memref<1x8x3xf32, #tpu.memory_space<vmem>>, vector<1x8x3xf32>
      %258 = vector.shape_cast %257 : vector<1x8x3xf32> to vector<8x3xf32>
      %259 = vector.shape_cast %256 : vector<8x3xf32> to vector<1x8x3xf32>
      tpu.vector_store %arg11[%c0_105, %c0_106, %c0_107], %259 {strides = array<i32>} : memref<1x8x3xf32, #tpu.memory_space<vmem>>, vector<1x8x3xf32>,
    } else {
    }
    return
  }
  func.func @transform_0(%arg0: i32, %arg1: i32) -> (i32, i32, i32) {
    %c0_i32 = arith.constant 0 : i32
    %c0_i32_0 = arith.constant 0 : i32
    return %arg0, %arg1, %c0_i32 : i32, i32, i32
  }
  func.func @transform_1(%arg0: i32, %arg1: i32) -> (i32, i32, i32) {
    %c0_i32 = arith.constant 0 : i32
    %c0_i32_0 = arith.constant 0 : i32
    %c0_i32_1 = arith.constant 0 : i32
    return %arg0, %c0_i32, %c0_i32_0 : i32, i32, i32
  }
  func.func @transform_2(%arg0: i32, %arg1: i32) -> (i32, i32) {
    %c0_i32 = arith.constant 0 : i32
    %c0_i32_0 = arith.constant 0 : i32
    %c0_i32_1 = arith.constant 0 : i32
    return %c0_i32, %c0_i32_0 : i32, i32
  }
  func.func @transform_3(%arg0: i32, %arg1: i32) -> (i32, i32) {
    %c0_i32 = arith.constant 0 : i32
    %c0_i32_0 = arith.constant 0 : i32
    %c0_i32_1 = arith.constant 0 : i32
    return %c0_i32, %c0_i32_0 : i32, i32
  }
  func.func @transform_4(%arg0: i32, %arg1: i32) -> (i32, i32) {
    %c0_i32 = arith.constant 0 : i32
    %c0_i32_0 = arith.constant 0 : i32
    %c0_i32_1 = arith.constant 0 : i32
    return %c0_i32, %c0_i32_0 : i32, i32
  }
  func.func @transform_5(%arg0: i32, %arg1: i32) -> (i32, i32) {
    %c0_i32 = arith.constant 0 : i32
    %c0_i32_0 = arith.constant 0 : i32
    %c0_i32_1 = arith.constant 0 : i32
    return %c0_i32, %c0_i32_0 : i32, i32
  }
  func.func @transform_6(%arg0: i32, %arg1: i32) -> (i32, i32) {
    %c0_i32 = arith.constant 0 : i32
    %c0_i32_0 = arith.constant 0 : i32
    %c0_i32_1 = arith.constant 0 : i32
    return %c0_i32, %c0_i32_0 : i32, i32
  }
  func.func @transform_7(%arg0: i32, %arg1: i32) -> (i32, i32) {
    %c0_i32 = arith.constant 0 : i32
    %c0_i32_0 = arith.constant 0 : i32
    %c0_i32_1 = arith.constant 0 : i32
    return %c0_i32, %c0_i32_0 : i32, i32
  }
  func.func @transform_8(%arg0: i32, %arg1: i32) -> (i32, i32) {
    %c0_i32 = arith.constant 0 : i32
    %c0_i32_0 = arith.constant 0 : i32
    %c0_i32_1 = arith.constant 0 : i32
    return %c0_i32, %c0_i32_0 : i32, i32
  }
  func.func @transform_9(%arg0: i32, %arg1: i32) -> (i32, i32, i32) {
    %c0_i32 = arith.constant 0 : i32
    %c0_i32_0 = arith.constant 0 : i32
    %c0_i32_1 = arith.constant 0 : i32
    return %arg0, %c0_i32, %c0_i32_0 : i32, i32, i32
  }
}

</mosaic_0001>

<llo_original>
// kernel: tpu_custom_call.1
$region0: #{tpu_custom_call.1}
  #allocation0 [shape = 'u32[]', space=smem, size = 0x4, offset = 0x4, fixed_abs, tag = 'smem constant byte address 0x4 - core index']
  #allocation1 [shape = 'u32[144,128]{1,0:T(1,128)}', space=vmem, size = 0x12000, scoped, tag = 'internal scratch']
  #allocation2 [shape = 'f32[32,128]{1,0:T(8,128)}', space=vmem, size = 0x4000, scoped, tag = 'scratch operand']
  #allocation3 [shape = 'f32[8,128]{1,0:T(8,128)}', space=vmem, size = 0x1000, scoped, tag = 'scratch operand']
  #allocation4 [shape = 'f32[8,32]{1,0:T(8,128)}', space=vmem, size = 0x1000, scoped, tag = 'scratch operand']
  #allocation5 [shape = 'f32[8,32]{1,0:T(8,128)}', space=vmem, size = 0x1000, scoped, tag = 'scratch operand']
  #allocation6 [shape = 'f32[8,8,32]{2,1,0:T(8,128)}', space=vmem, size = 0x8000, scoped, tag = 'scratch operand']
  %s0 = inlined_call_operand.vmem [shape: bf16[1,64,16], index: 0, kind: input, shape index: {}]
  %s1 = inlined_call_operand.vmem [shape: bf16[1,8,16], index: 1, kind: input, shape index: {}]
  %s2 = inlined_call_operand.vmem [shape: bf16[16,128], index: 2, kind: input, shape index: {}]
  %s3 = inlined_call_operand.vmem [shape: bf16[16,128], index: 3, kind: input, shape index: {}]
  %s4 = inlined_call_operand.vmem [shape: bf16[32,128], index: 4, kind: input, shape index: {}]
  %s5 = inlined_call_operand.vmem [shape: f32[1,128], index: 5, kind: input, shape index: {}]
  %s6 = inlined_call_operand.vmem [shape: f32[1,32], index: 6, kind: input, shape index: {}]
  %s7 = inlined_call_operand.vmem [shape: bf16[32,3], index: 7, kind: input, shape index: {}]
  %s8 = inlined_call_operand.vmem [shape: f32[1,3], index: 8, kind: input, shape index: {}]
  %s9 = inlined_call_operand.vmem [shape: f32[1,8,3], index: 9, kind: output, shape index: {}]
  %s10 = sld [smem:[#allocation0]]
  $region77: #{tpu_custom_call.1} parent=0
    _
  %s12 = ssub.s32 1, %s10
  %s13 = scalar_select 0, %s12, %s10
  loop: start=0, step=1, limit=4
  $region2: #{tpu_custom_call.1} parent=0 // loop_pre_header
    _
  $region3: #{tpu_custom_call.1} parent=0 // loop_header
    %s15 = sphi 0, %s19
    %p16 = scmp.ge.s32.totalorder %s15, 4
    %s22 = sphi 0, %s34
    %s23 = sphi 0, %s30
    %s24 = sphi 0, %s22
    %s25 = sphi 0, %s23
    %s26 = sphi 0, %s24
    %s27 = sphi 0, %s25
    %s39 = sphi 0, %s41
    %s42 = sphi 0, %s39
    %s43 = sphi 0, %s42
    %s59 = sphi 0, %s43
    %s65 = sphi 0, %s67
    %s68 = sphi 0, %s65
    %s69 = sphi 0, %s68
    %s85 = sphi 0, %s69
    %s89 = sphi 0, %s89
    %s91 = sphi 0, %s89
    %s92 = sphi 0, %s91
    %s106 = sphi 0, %s92
    %s110 = sphi 0, %s110
    %s112 = sphi 0, %s110
    %s113 = sphi 0, %s112
    %s127 = sphi 0, %s113
    %s131 = sphi 0, %s131
    %s133 = sphi 0, %s131
    %s134 = sphi 0, %s133
    %s148 = sphi 0, %s134
    %s152 = sphi 0, %s152
    %s154 = sphi 0, %s152
    %s155 = sphi 0, %s154
    %s169 = sphi 0, %s155
    %s173 = sphi 0, %s173
    %s175 = sphi 0, %s173
    %s176 = sphi 0, %s175
    %s190 = sphi 0, %s176
    %s194 = sphi 0, %s194
    %s196 = sphi 0, %s194
    %s197 = sphi 0, %s196
    %s211 = sphi 0, %s197
    %s215 = sphi 0, %s215
    %s217 = sphi 0, %s215
    %s218 = sphi 0, %s217
    %s232 = sphi 0, %s218
    %s238 = sphi 0, %s240
    %s241 = sphi 0, %s238
    %s242 = sphi 0, %s241
    %s258 = sphi 0, %s242
  $region4: #{tpu_custom_call.1} parent=0 // loop_header_branch
    %18 = sbr.rel (%p16) target = $region8
  $region5: #{tpu_custom_call.1} parent=0 // loop_body
    %s20 = ssub.s32 %s15, 1
    %s21 = ssub.s32 %s15, 2
    %s28 = sadd.s32 1, %s23
    %p29 = scmp.ge.s32.totalorder %s28, 2
    %s30 = scalar_select %p29, 0, %s28
    %s31 = sadd.s32 1, %s22
    %s32 = scalar_select %p29, %s31, %s22
    %p33 = scmp.ge.s32.totalorder %s32, 1
    %s34 = scalar_select %p33, 0, %s32
    %s35 = ssub.s32 %s22, %s34
    %s36 = ssub.s32 %s23, %s30
    %s37 = sor.u32 %s35, %s36
    %p38 = scmp.eq.s32.totalorder %s37, 0
    %s40 = sadd.s32 %s39, 1
    %s41 = scalar_select %p38, %s39, %s40
    %p44 = pneg %p38
    %p45 = scmp.eq.s32.totalorder %s15, 1
    %p46 = por %p44, %p45
    %p47 = scmp.ne.s32.totalorder %s39, %s42
    %p48 = scmp.eq.s32.totalorder %s15, 0
    %p49 = por %p47, %p48
    %p50 = scmp.ne.s32.totalorder %s39, %s42
    %p51 = scmp.eq.s32.totalorder %s20, 1
    %p52 = por %p50, %p51
    %p53 = scmp.ne.s32.totalorder %s42, %s43
    %p54 = scmp.eq.s32.totalorder %s20, 0
    %p55 = por %p53, %p54
    %p56 = scmp.ne.s32.totalorder %s42, %s43
    %p57 = scmp.eq.s32.totalorder %s21, 1
    %p58 = por %p56, %p57
    %p60 = scmp.ne.s32.totalorder %s43, %s59
    %p61 = scmp.eq.s32.totalorder %s21, 0
    %p62 = por %p60, %p61
    %s63 = ssub.s32 %s22, %s34
    %p64 = scmp.eq.s32.totalorder %s63, 0
    %s66 = sadd.s32 %s65, 1
    %s67 = scalar_select %p64, %s65, %s66
    %p70 = pneg %p64
    %p71 = scmp.eq.s32.totalorder %s15, 1
    %p72 = por %p70, %p71
    %p73 = scmp.ne.s32.totalorder %s65, %s68
    %p74 = scmp.eq.s32.totalorder %s15, 0
    %p75 = por %p73, %p74
    %p76 = scmp.ne.s32.totalorder %s65, %s68
    %p77 = scmp.eq.s32.totalorder %s20, 1
    %p78 = por %p76, %p77
    %p79 = scmp.ne.s32.totalorder %s68, %s69
    %p80 = scmp.eq.s32.totalorder %s20, 0
    %p81 = por %p79, %p80
    %p82 = scmp.ne.s32.totalorder %s68, %s69
    %p83 = scmp.eq.s32.totalorder %s21, 1
    %p84 = por %p82, %p83
    %p86 = scmp.ne.s32.totalorder %s69, %s85
    %p87 = scmp.eq.s32.totalorder %s21, 0
    %p88 = por %p86, %p87
    %s90 = sadd.s32 %s89, 1
    %p93 = scmp.eq.s32.totalorder %s15, 1
    %p94 = scmp.ne.s32.totalorder %s89, %s91
    %p95 = scmp.eq.s32.totalorder %s15, 0
    %p96 = por %p94, %p95
    %p97 = scmp.ne.s32.totalorder %s89, %s91
    %p98 = scmp.eq.s32.totalorder %s20, 1
    %p99 = por %p97, %p98
    %p100 = scmp.ne.s32.totalorder %s91, %s92
    %p101 = scmp.eq.s32.totalorder %s20, 0
    %p102 = por %p100, %p101
    %p103 = scmp.ne.s32.totalorder %s91, %s92
    %p104 = scmp.eq.s32.totalorder %s21, 1
    %p105 = por %p103, %p104
    %p107 = scmp.ne.s32.totalorder %s92, %s106
    %p108 = scmp.eq.s32.totalorder %s21, 0
    %p109 = por %p107, %p108
    %s111 = sadd.s32 %s110, 1
    %p114 = scmp.eq.s32.totalorder %s15, 1
    %p115 = scmp.ne.s32.totalorder %s110, %s112
    %p116 = scmp.eq.s32.totalorder %s15, 0
    %p117 = por %p115, %p116
    %p118 = scmp.ne.s32.totalorder %s110, %s112
    %p119 = scmp.eq.s32.totalorder %s20, 1
    %p120 = por %p118, %p119
    %p121 = scmp.ne.s32.totalorder %s112, %s113
    %p122 = scmp.eq.s32.totalorder %s20, 0
    %p123 = por %p121, %p122
    %p124 = scmp.ne.s32.totalorder %s112, %s113
    %p125 = scmp.eq.s32.totalorder %s21, 1
    %p126 = por %p124, %p125
    %p128 = scmp.ne.s32.totalorder %s113, %s127
    %p129 = scmp.eq.s32.totalorder %s21, 0
    %p130 = por %p128, %p129
    %s132 = sadd.s32 %s131, 1
    %p135 = scmp.eq.s32.totalorder %s15, 1
    %p136 = scmp.ne.s32.totalorder %s131, %s133
    %p137 = scmp.eq.s32.totalorder %s15, 0
    %p138 = por %p136, %p137
    %p139 = scmp.ne.s32.totalorder %s131, %s133
    %p140 = scmp.eq.s32.totalorder %s20, 1
    %p141 = por %p139, %p140
    %p142 = scmp.ne.s32.totalorder %s133, %s134
    %p143 = scmp.eq.s32.totalorder %s20, 0
    %p144 = por %p142, %p143
    %p145 = scmp.ne.s32.totalorder %s133, %s134
    %p146 = scmp.eq.s32.totalorder %s21, 1
    %p147 = por %p145, %p146
    %p149 = scmp.ne.s32.totalorder %s134, %s148
    %p150 = scmp.eq.s32.totalorder %s21, 0
    %p151 = por %p149, %p150
    %s153 = sadd.s32 %s152, 1
    %p156 = scmp.eq.s32.totalorder %s15, 1
    %p157 = scmp.ne.s32.totalorder %s152, %s154
    %p158 = scmp.eq.s32.totalorder %s15, 0
    %p159 = por %p157, %p158
    %p160 = scmp.ne.s32.totalorder %s152, %s154
    %p161 = scmp.eq.s32.totalorder %s20, 1
    %p162 = por %p160, %p161
    %p163 = scmp.ne.s32.totalorder %s154, %s155
    %p164 = scmp.eq.s32.totalorder %s20, 0
    %p165 = por %p163, %p164
    %p166 = scmp.ne.s32.totalorder %s154, %s155
    %p167 = scmp.eq.s32.totalorder %s21, 1
    %p168 = por %p166, %p167
    %p170 = scmp.ne.s32.totalorder %s155, %s169
    %p171 = scmp.eq.s32.totalorder %s21, 0
    %p172 = por %p170, %p171
    %s174 = sadd.s32 %s173, 1
    %p177 = scmp.eq.s32.totalorder %s15, 1
    %p178 = scmp.ne.s32.totalorder %s173, %s175
    %p179 = scmp.eq.s32.totalorder %s15, 0
    %p180 = por %p178, %p179
    %p181 = scmp.ne.s32.totalorder %s173, %s175
    %p182 = scmp.eq.s32.totalorder %s20, 1
    %p183 = por %p181, %p182
    %p184 = scmp.ne.s32.totalorder %s175, %s176
    %p185 = scmp.eq.s32.totalorder %s20, 0
    %p186 = por %p184, %p185
    %p187 = scmp.ne.s32.totalorder %s175, %s176
    %p188 = scmp.eq.s32.totalorder %s21, 1
    %p189 = por %p187, %p188
    %p191 = scmp.ne.s32.totalorder %s176, %s190
    %p192 = scmp.eq.s32.totalorder %s21, 0
    %p193 = por %p191, %p192
    %s195 = sadd.s32 %s194, 1
    %p198 = scmp.eq.s32.totalorder %s15, 1
    %p199 = scmp.ne.s32.totalorder %s194, %s196
    %p200 = scmp.eq.s32.totalorder %s15, 0
    %p201 = por %p199, %p200
    %p202 = scmp.ne.s32.totalorder %s194, %s196
    %p203 = scmp.eq.s32.totalorder %s20, 1
    %p204 = por %p202, %p203
    %p205 = scmp.ne.s32.totalorder %s196, %s197
    %p206 = scmp.eq.s32.totalorder %s20, 0
    %p207 = por %p205, %p206
    %p208 = scmp.ne.s32.totalorder %s196, %s197
    %p209 = scmp.eq.s32.totalorder %s21, 1
    %p210 = por %p208, %p209
    %p212 = scmp.ne.s32.totalorder %s197, %s211
    %p213 = scmp.eq.s32.totalorder %s21, 0
    %p214 = por %p212, %p213
    %s216 = sadd.s32 %s215, 1
    %p219 = scmp.eq.s32.totalorder %s15, 1
    %p220 = scmp.ne.s32.totalorder %s215, %s217
    %p221 = scmp.eq.s32.totalorder %s15, 0
    %p222 = por %p220, %p221
    %p223 = scmp.ne.s32.totalorder %s215, %s217
    %p224 = scmp.eq.s32.totalorder %s20, 1
    %p225 = por %p223, %p224
    %p226 = scmp.ne.s32.totalorder %s217, %s218
    %p227 = scmp.eq.s32.totalorder %s20, 0
    %p228 = por %p226, %p227
    %p229 = scmp.ne.s32.totalorder %s217, %s218
    %p230 = scmp.eq.s32.totalorder %s21, 1
    %p231 = por %p229, %p230
    %p233 = scmp.ne.s32.totalorder %s218, %s232
    %p234 = scmp.eq.s32.totalorder %s21, 0
    %p235 = por %p233, %p234
    %s236 = ssub.s32 %s22, %s34
    %p237 = scmp.eq.s32.totalorder %s236, 0
    %s239 = sadd.s32 %s238, 1
    %s240 = scalar_select %p237, %s238, %s239
    %p243 = pneg %p237
    %p244 = scmp.eq.s32.totalorder %s15, 1
    %p245 = por %p243, %p244
    %p246 = scmp.ne.s32.totalorder %s238, %s241
    %p247 = scmp.eq.s32.totalorder %s15, 0
    %p248 = por %p246, %p247
    %p249 = scmp.ne.s32.totalorder %s238, %s241
    %p250 = scmp.eq.s32.totalorder %s20, 1
    %p251 = por %p249, %p250
    %p252 = scmp.ne.s32.totalorder %s241, %s242
    %p253 = scmp.eq.s32.totalorder %s20, 0
    %p254 = por %p252, %p253
    %p255 = scmp.ne.s32.totalorder %s241, %s242
    %p256 = scmp.eq.s32.totalorder %s21, 1
    %p257 = por %p255, %p256
    %p259 = scmp.ne.s32.totalorder %s242, %s258
    %p260 = scmp.eq.s32.totalorder %s21, 0
    %p261 = por %p259, %p260
    %p262 = scmp.le.s32.totalorder 1, %s15
    %p263 = scmp.lt.s32.totalorder %s15, 3
    %p264 = pnand %p262, %p263
    %p265 = pneg %p264
    // Predicated region
    $region9: #{tpu_custom_call.1} parent=5 // pred_check
      _
    $region10: #{tpu_custom_call.1} parent=5 // pred_check_branch
      %267 = sbr.rel (%p264) target = $region12
    $region11: #{tpu_custom_call.1} parent=5 // pred_region
      %s268 = ssub.s32 %s15, 1
      // Predicated region
      $region13: #{tpu_custom_call.1} parent=11 // pred_check
        %p269 = pneg %p81
      $region14: #{tpu_custom_call.1} parent=11 // pred_check_branch
        %271 = sbr.rel (%p269) target = $region16
      $region15: #{tpu_custom_call.1} parent=11 // pred_region
        %p272 = scmp.lt.s32.totalorder %s24, 0
        %s273 = scalar_select %p272, %s24, 0
        %s274 = smul.addr %s273, 4
        %s275 = scalar_lea.vmem %s1, %s274
      $region16: #{tpu_custom_call.1} parent=11 // pred_fallthru
        _
      // Predicated region
      $region17: #{tpu_custom_call.1} parent=11 // pred_check
        %p276 = pneg %p102
      $region18: #{tpu_custom_call.1} parent=11 // pred_check_branch
        %278 = sbr.rel (%p276) target = $region20
      $region19: #{tpu_custom_call.1} parent=11 // pred_region
        _
      $region20: #{tpu_custom_call.1} parent=11 // pred_fallthru
        _
      // Predicated region
      $region21: #{tpu_custom_call.1} parent=11 // pred_check
        %p279 = pneg %p123
      $region22: #{tpu_custom_call.1} parent=11 // pred_check_branch
        %281 = sbr.rel (%p279) target = $region24
      $region23: #{tpu_custom_call.1} parent=11 // pred_region
        _
      $region24: #{tpu_custom_call.1} parent=11 // pred_fallthru
        _
      // Predicated region
      $region25: #{tpu_custom_call.1} parent=11 // pred_check
        %p282 = pneg %p144
      $region26: #{tpu_custom_call.1} parent=11 // pred_check_branch
        %284 = sbr.rel (%p282) target = $region28
      $region27: #{tpu_custom_call.1} parent=11 // pred_region
        _
      $region28: #{tpu_custom_call.1} parent=11 // pred_fallthru
        _
      // Predicated region
      $region29: #{tpu_custom_call.1} parent=11 // pred_check
        %p285 = pneg %p165
      $region30: #{tpu_custom_call.1} parent=11 // pred_check_branch
        %287 = sbr.rel (%p285) target = $region32
      $region31: #{tpu_custom_call.1} parent=11 // pred_region
        _
      $region32: #{tpu_custom_call.1} parent=11 // pred_fallthru
        _
      // Predicated region
      $region33: #{tpu_custom_call.1} parent=11 // pred_check
        %p288 = pneg %p186
      $region34: #{tpu_custom_call.1} parent=11 // pred_check_branch
        %290 = sbr.rel (%p288) target = $region36
      $region35: #{tpu_custom_call.1} parent=11 // pred_region
        _
      $region36: #{tpu_custom_call.1} parent=11 // pred_fallthru
        _
      // Predicated region
      $region37: #{tpu_custom_call.1} parent=11 // pred_check
        %p291 = pneg %p207
      $region38: #{tpu_custom_call.1} parent=11 // pred_check_branch
        %293 = sbr.rel (%p291) target = $region40
      $region39: #{tpu_custom_call.1} parent=11 // pred_region
        _
      $region40: #{tpu_custom_call.1} parent=11 // pred_fallthru
        _
      // Predicated region
      $region41: #{tpu_custom_call.1} parent=11 // pred_check
        %p294 = pneg %p228
      $region42: #{tpu_custom_call.1} parent=11 // pred_check_branch
        %296 = sbr.rel (%p294) target = $region44
      $region43: #{tpu_custom_call.1} parent=11 // pred_region
        _
      $region44: #{tpu_custom_call.1} parent=11 // pred_fallthru
        _
    $region12: #{tpu_custom_call.1} parent=5 // pred_fallthru
      _
    %p297 = scmp.lt.s32.totalorder %s15, 2
    // Predicated region
    $region45: #{tpu_custom_call.1} parent=5 // pred_check
      %p298 = pneg %p297
    $region46: #{tpu_custom_call.1} parent=5 // pred_check_branch
      %300 = sbr.rel (%p298) target = $region48
    $region47: #{tpu_custom_call.1} parent=5 // pred_region
      // Predicated region
      $region49: #{tpu_custom_call.1} parent=47 // pred_check
        %p301 = pneg %p49
      $region50: #{tpu_custom_call.1} parent=47 // pred_check_branch
        %303 = sbr.rel (%p301) target = $region52
      $region51: #{tpu_custom_call.1} parent=47 // pred_region
        %s304 = smul.u32 4, %s23
        %p305 = scmp.lt.s32.totalorder %s22, 0
        %s306 = scalar_select %p305, %s22, 0
        %p307 = scmp.lt.s32.totalorder %s304, 7
        %s308 = scalar_select %p307, %s304, 7
        %s309 = smul.addr %s306, 8
        %s310 = sadd.s32 %s308, %s309
        %s311 = smul.addr %s310, 4
        %s312 = scalar_lea.vmem %s0, %s311
        %s313 = smul.u32 4, %s23
      $region52: #{tpu_custom_call.1} parent=47 // pred_fallthru
        _
    $region48: #{tpu_custom_call.1} parent=5 // pred_fallthru
      _
    %p314 = scmp.le.s32.totalorder 1, %s15
    %p315 = scmp.lt.s32.totalorder %s15, 3
    %p316 = pnand %p314, %p315
    %p317 = pneg %p316
    // Predicated region
    $region53: #{tpu_custom_call.1} parent=5 // pred_check
      _
    $region54: #{tpu_custom_call.1} parent=5 // pred_check_branch
      %319 = sbr.rel (%p316) target = $region56
    $region55: #{tpu_custom_call.1} parent=5 // pred_region
      %s320 = ssub.s32 %s15, 1
      %s321 = smul.u32 4, %s25
      %p322 = scmp.lt.s32.totalorder %s24, 0
      %s323 = scalar_select %p322, %s24, 0
      %p324 = scmp.lt.s32.totalorder %s321, 7
      %s325 = scalar_select %p324, %s321, 7
      %s326 = smul.addr %s323, 8
      %s327 = sadd.s32 %s325, %s326
      %s328 = smul.addr %s327, 4
      %s329 = scalar_lea.vmem %s0, %s328
      %p330 = pneg %p55
      %p331 = pneg %p52
      %p332 = scmp.lt.s32.totalorder %s24, 0
      %s333 = scalar_select %p332, %s24, 0
      %s334 = smul.addr %s333, 4
      %s335 = scalar_lea.vmem %s1, %s334
      %p336 = pneg %p81
      %p337 = pneg %p78
      %p338 = pneg %p102
      %p339 = pneg %p99
      %p340 = pneg %p123
      %p341 = pneg %p120
      %p342 = pneg %p144
      %p343 = pneg %p141
      %p344 = pneg %p165
      %p345 = pneg %p162
      %p346 = pneg %p186
      %p347 = pneg %p183
      %p348 = pneg %p207
      %p349 = pneg %p204
      %p350 = pneg %p228
      %p351 = pneg %p225
      %p352 = pneg %p254
      %p353 = pneg %p251
      %p354 = scmp.lt.s32.totalorder %s24, 0
      %s355 = scalar_select %p354, %s24, 0
      %s356 = smul.addr %s355, 8
      %s357 = scalar_lea.vmem %s9, %s356
      %s358 = smul.u32 4, %s25
      %p359 = scmp.lt.s32.totalorder %s24, 0
      %s360 = scalar_select %p359, %s24, 0
      %p361 = scmp.lt.s32.totalorder %s358, 7
      %s362 = scalar_select %p361, %s358, 7
      %s363 = smul.addr %s360, 8
      %s364 = sadd.s32 %s362, %s363
      %s365 = smul.addr %s364, 4
      %s366 = scalar_lea.vmem %s0, %s365
      %s367 = smul.u32 4, %s25
      %p368 = scmp.lt.s32.totalorder %s24, 0
      %s369 = scalar_select %p368, %s24, 0
      %s370 = smul.addr %s369, 4
      %s371 = scalar_lea.vmem %s1, %s370
      %p372 = scmp.lt.s32.totalorder %s24, 0
      %s373 = scalar_select %p372, %s24, 0
      %s374 = smul.addr %s373, 8
      %s375 = scalar_lea.vmem %s9, %s374
      %p377 = scmp.eq.s32.totalorder %s25, 0
      // Predicated region
      $region57: #{tpu_custom_call.1} parent=55 // pred_check
        %p378 = pneg %p377
      $region58: #{tpu_custom_call.1} parent=55 // pred_check_branch
        %380 = sbr.rel (%p378) target = $region60
      $region59: #{tpu_custom_call.1} parent=55 // pred_region
        %vm381 = vcmask 261120
        %382 = vst.msk [vmem:[#allocation4] sm:$0xff] %vm381, 0.0
        %383 = vst.msk [vmem:[#allocation5] sm:$0xff] %vm381, 0.0
        %v384 = vld [vmem:[%s371] sm:$0xf]
        %v385 = vld [vmem:[%s3] sm:$0xf]
        %v386 = vld [vmem:[%s3 + $0x4] sm:$0xf]
        %v387 = vld [vmem:[%s5] sm:$0x1]
        %v389 = vlaneseq
        %v390 = vshrl.u32 %v389, 7
        %v391 = vsub.s32 0, %v390
        %v392 = vrot.slane %v387, %v391
        %v396 = vunpack.c.l.b16 %v385
        %v397 = vunpack.c.l.b16 %v386
        %v398 = vpack.c.b16 %v397, %v396
        %vm400 = vcmask 130048
        %v402 = vsel %vm400, %v384, 0
        %404 = vmatprep.subr.bf16.mxu0 0
        %405 = vmatpush1.bf16.msra.mxu0 %v398
        %406 = vmatprep.subr.bf16.mxu0 0
        %407 = vmatpush1.bf16.msra.mxu0 0
        %408 = vmatprep.subr.bf16.mxu0 0
        %409 = vmatpush1.bf16.msra.mxu0 0
        %410 = vmatprep.subr.bf16.mxu0 0
        %411 = vmatpush1.bf16.msra.mxu0 0
        %412 = vmatprep.subr.bf16.mxu0 0
        %413 = vmatpush1.bf16.msra.mxu0 0
        %414 = vmatprep.subr.bf16.mxu0 0
        %415 = vmatpush1.bf16.msra.mxu0 0
        %416 = vmatprep.subr.bf16.mxu0 0
        %417 = vmatpush1.bf16.msra.mxu0 0
        %418 = vmatprep.subr.bf16.mxu0 0
        %419 = vmatpush1.bf16.msra.mxu0 0
        %420 = vmatprep.subr.bf16.mxu0 0
        %421 = vmatpush1.bf16.msra.mxu0 0
        %422 = vmatprep.subr.bf16.mxu0 0
        %423 = vmatpush1.bf16.msra.mxu0 0
        %424 = vmatprep.subr.bf16.mxu0 0
        %425 = vmatpush1.bf16.msra.mxu0 0
        %426 = vmatprep.subr.bf16.mxu0 0
        %427 = vmatpush1.bf16.msra.mxu0 0
        %428 = vmatprep.subr.bf16.mxu0 0
        %429 = vmatpush1.bf16.msra.mxu0 0
        %430 = vmatprep.subr.bf16.mxu0 0
        %431 = vmatpush1.bf16.msra.mxu0 0
        %432 = vmatprep.subr.bf16.mxu0 0
        %433 = vmatpush1.bf16.msra.mxu0 0
        %434 = vmatprep.subr.bf16.mxu0 0
        %435 = vmatpush1.bf16.msra.mxu0 0
        %436 = vmatprep.mubr.bf16.mxu0 0
        %437 = vmatmul.mubr.bf16.gmra.mrb[0].mxu0 %v402
        %v438 = vpop.f32.mrb[0].mxu0
        %v439 = vadd.f32 %v392, %v438
        %v440 = vpop.f32.mrb[0].mxu0
        %v441 = vpop.f32.mrb[0].mxu0
        %v442 = vpop.f32.mrb[0].mxu0
        %443 = vdwg.mxu0
        %444 = vst [vmem:[#allocation3] sm:$0xff] %v439
      $region60: #{tpu_custom_call.1} parent=55 // pred_fallthru
        _
      %v445 = vld [vmem:[%s366] sm:$0xf]
      %v446 = vld [vmem:[%s366 + $0x4] sm:$0xf]
      %v447 = vld [vmem:[%s366 + $0x8] sm:$0xf]
      %v448 = vld [vmem:[%s366 + $0xc] sm:$0xf]
      %v449 = vld [vmem:[%s2] sm:$0xf]
      %v450 = vld [vmem:[%s2 + $0x4] sm:$0xf]
      %v455 = vunpack.c.l.b16 %v445
      %v456 = vunpack.c.l.b16 %v446
      %v457 = vunpack.c.l.b16 %v447
      %v458 = vunpack.c.l.b16 %v448
      %v459 = vpack.c.b16 %v456, %v455
      %v460 = vpack.c.b16 %v458, %v457
      %v463 = vunpack.c.l.b16 %v449
      %v464 = vunpack.c.l.b16 %v450
      %v465 = vpack.c.b16 %v464, %v463
      %vm467 = vcmask 130048
      %v469 = vsel %vm467, %v459, 0
      %v472 = vsel %vm467, %v460, 0
      %474 = vmatprep.subr.bf16.mxu0 0
      %475 = vmatpush1.bf16.msra.mxu0 %v465
      %476 = vmatprep.subr.bf16.mxu0 0
      %477 = vmatpush1.bf16.msra.mxu0 0
      %478 = vmatprep.subr.bf16.mxu0 0
      %479 = vmatpush1.bf16.msra.mxu0 0
      %480 = vmatprep.subr.bf16.mxu0 0
      %481 = vmatpush1.bf16.msra.mxu0 0
      %482 = vmatprep.subr.bf16.mxu0 0
      %483 = vmatpush1.bf16.msra.mxu0 0
      %484 = vmatprep.subr.bf16.mxu0 0
      %485 = vmatpush1.bf16.msra.mxu0 0
      %486 = vmatprep.subr.bf16.mxu0 0
      %487 = vmatpush1.bf16.msra.mxu0 0
      %488 = vmatprep.subr.bf16.mxu0 0
      %489 = vmatpush1.bf16.msra.mxu0 0
      %490 = vmatprep.subr.bf16.mxu0 0
      %491 = vmatpush1.bf16.msra.mxu0 0
      %492 = vmatprep.subr.bf16.mxu0 0
      %493 = vmatpush1.bf16.msra.mxu0 0
      %494 = vmatprep.subr.bf16.mxu0 0
      %495 = vmatpush1.bf16.msra.mxu0 0
      %496 = vmatprep.subr.bf16.mxu0 0
      %497 = vmatpush1.bf16.msra.mxu0 0
      %498 = vmatprep.subr.bf16.mxu0 0
      %499 = vmatpush1.bf16.msra.mxu0 0
      %500 = vmatprep.subr.bf16.mxu0 0
      %501 = vmatpush1.bf16.msra.mxu0 0
      %502 = vmatprep.subr.bf16.mxu0 0
      %503 = vmatpush1.bf16.msra.mxu0 0
      %504 = vmatprep.subr.bf16.mxu0 0
      %505 = vmatpush1.bf16.msra.mxu0 0
      %506 = vmatprep.mubr.bf16.mxu0 0
      %507 = vmatmul.mubr.bf16.gmra.mrb[0].mxu0 %v469
      %v508 = vpop.f32.mrb[0].mxu0
      %v509 = vadd.f32 0.0, %v508
      %v510 = vpop.f32.mrb[0].mxu0
      %v511 = vpop.f32.mrb[0].mxu0
      %v512 = vadd.f32 0.0, %v511
      %v513 = vpop.f32.mrb[0].mxu0
      %514 = vmatprep.mubr.bf16.mxu0 0
      %515 = vmatmul.mubr.bf16.gmra.mrb[0].mxu0 %v472
      %v516 = vpop.f32.mrb[0].mxu0
      %v517 = vadd.f32 0.0, %v516
      %v518 = vpop.f32.mrb[0].mxu0
      %v519 = vpop.f32.mrb[0].mxu0
      %v520 = vadd.f32 0.0, %v519
      %v521 = vpop.f32.mrb[0].mxu0
      %522 = vdwg.mxu0
      %523 = vst [vmem:[#allocation2] sm:$0xff] %v509
      %524 = vst [vmem:[#allocation2 + $0x8] sm:$0xff] %v512
      %525 = vst [vmem:[#allocation2 + $0x10] sm:$0xff] %v517
      %526 = vst [vmem:[#allocation2 + $0x18] sm:$0xff] %v520
      %v527 = vld [vmem:[%s4] sm:$0xf]
      %v528 = vld [vmem:[%s4 + $0x4] sm:$0xf]
      %v529 = vld [vmem:[%s4 + $0x8] sm:$0xf]
      %v530 = vld [vmem:[%s4 + $0xc] sm:$0xf]
      %v531 = vld [vmem:[#allocation3] sm:$0xff]
      %v532 = vld [vmem:[#allocation4] sm:$0xff]
      %v533 = vld [vmem:[#allocation5] sm:$0xff]
      %v534 = vld [vmem:[#allocation2] sm:$0xff]
      %v535 = vadd.f32 %v534, %v531
      %v536 = vpack.c.bf16 %v532, %v532
      %v541 = vunpack.c.l.b16 %v527
      %v542 = vunpack.c.l.b16 %v528
      %v543 = vunpack.c.l.b16 %v529
      %v544 = vunpack.c.l.b16 %v530
      %v545 = vpack.c.b16 %v542, %v541
      %v546 = vpack.c.b16 %v544, %v543
      %vm549 = vcmask 261120
      %v551 = vsel %vm549, %v536, 0
      %553 = vmatprep.subr.bf16.mxu0 0
      %554 = vmatpush1.bf16.msra.mxu0 %v545
      %555 = vmatprep.subr.bf16.mxu0 0
      %556 = vmatpush1.bf16.msra.mxu0 %v546
      %557 = vmatprep.subr.bf16.mxu0 0
      %558 = vmatpush1.bf16.msra.mxu0 0
      %559 = vmatprep.subr.bf16.mxu0 0
      %560 = vmatpush1.bf16.msra.mxu0 0
      %561 = vmatprep.subr.bf16.mxu0 0
      %562 = vmatpush1.bf16.msra.mxu0 0
      %563 = vmatprep.subr.bf16.mxu0 0
      %564 = vmatpush1.bf16.msra.mxu0 0
      %565 = vmatprep.subr.bf16.mxu0 0
      %566 = vmatpush1.bf16.msra.mxu0 0
      %567 = vmatprep.subr.bf16.mxu0 0
      %568 = vmatpush1.bf16.msra.mxu0 0
      %569 = vmatprep.subr.bf16.mxu0 0
      %570 = vmatpush1.bf16.msra.mxu0 0
      %571 = vmatprep.subr.bf16.mxu0 0
      %572 = vmatpush1.bf16.msra.mxu0 0
      %573 = vmatprep.subr.bf16.mxu0 0
      %574 = vmatpush1.bf16.msra.mxu0 0
      %575 = vmatprep.subr.bf16.mxu0 0
      %576 = vmatpush1.bf16.msra.mxu0 0
      %577 = vmatprep.subr.bf16.mxu0 0
      %578 = vmatpush1.bf16.msra.mxu0 0
      %579 = vmatprep.subr.bf16.mxu0 0
      %580 = vmatpush1.bf16.msra.mxu0 0
      %581 = vmatprep.subr.bf16.mxu0 0
      %582 = vmatpush1.bf16.msra.mxu0 0
      %583 = vmatprep.subr.bf16.mxu0 0
      %584 = vmatpush1.bf16.msra.mxu0 0
      %585 = vmatprep.mubr.bf16.mxu0 0
      %586 = vmatmul.mubr.bf16.gmra.mrb[0].mxu0 %v551
      %v587 = vpop.f32.mrb[0].mxu0
      %v588 = vadd.f32 0.0, %v587
      %v589 = vpop.f32.mrb[0].mxu0
      %v590 = vpop.f32.mrb[0].mxu0
      %v591 = vpop.f32.mrb[0].mxu0
      %592 = vdwg.mxu0
      %v593 = vadd.f32 %v535, %v588
      %v594 = vxor.u32 %v593, 2147483648
      %v595 = vmul.f32 %v594, 1.442695
      %v596 = vpow.pop %v595
      %v597 = vadd.f32 %v596, 1.0
      %v598 = vrcp.pop %v597
      %v599 = vmul.f32 1.0, %v598
      %v600 = vtanh.pop %v593
      %602 = vrot.lane.b32.xlu0 %v533, 32
      %v603 = vpop.permute.xlu0 %602
      %v605 = vmul.f32 %v599, %v603
      %607 = vrot.lane.b32.xlu0 %v600, 32
      %v608 = vpop.permute.xlu0 %607
      %v610 = vmul.f32 %v599, %v608
      %612 = vrot.lane.b32.xlu0 %v610, 32
      %v613 = vpop.permute.xlu0 %612
      %v615 = vadd.f32 %v605, %v613
      %v616 = vtanh.pop %v615
      %618 = vrot.lane.b32.xlu0 %v616, 32
      %v619 = vpop.permute.xlu0 %618
      %v621 = vmul.f32 %v599, %v619
      %s622 = smul.u32 %s25, 4
      %624 = vrot.lane.b32.xlu0 %v621, 64
      %v625 = vpop.permute.xlu0 %624
      %s627 = smul.u32 %s622, 8
      %s628 = scalar_lea.vmem [#allocation6], %s627
      %629 = vst.msk [vmem:[%s628] sm:$0xff] %vm549, %v625
      %v630 = vld [vmem:[#allocation2 + $0x8] sm:$0xff]
      %v631 = vadd.f32 %v630, %v531
      %v632 = vpack.c.bf16 %v621, %v621
      %634 = vrot.lane.b32.xlu0 %v632, 64
      %v635 = vpop.permute.xlu0 %634
      %v637 = vsel %vm549, %v635, 0
      %639 = vmatprep.subr.bf16.mxu0 0
      %640 = vmatpush1.bf16.msra.mxu0 %v545
      %641 = vmatprep.subr.bf16.mxu0 0
      %642 = vmatpush1.bf16.msra.mxu0 %v546
      %643 = vmatprep.subr.bf16.mxu0 0
      %644 = vmatpush1.bf16.msra.mxu0 0
      %645 = vmatprep.subr.bf16.mxu0 0
      %646 = vmatpush1.bf16.msra.mxu0 0
      %647 = vmatprep.subr.bf16.mxu0 0
      %648 = vmatpush1.bf16.msra.mxu0 0
      %649 = vmatprep.subr.bf16.mxu0 0
      %650 = vmatpush1.bf16.msra.mxu0 0
      %651 = vmatprep.subr.bf16.mxu0 0
      %652 = vmatpush1.bf16.msra.mxu0 0
      %653 = vmatprep.subr.bf16.mxu0 0
      %654 = vmatpush1.bf16.msra.mxu0 0
      %655 = vmatprep.subr.bf16.mxu0 0
      %656 = vmatpush1.bf16.msra.mxu0 0
      %657 = vmatprep.subr.bf16.mxu0 0
      %658 = vmatpush1.bf16.msra.mxu0 0
      %659 = vmatprep.subr.bf16.mxu0 0
      %660 = vmatpush1.bf16.msra.mxu0 0
      %661 = vmatprep.subr.bf16.mxu0 0
      %662 = vmatpush1.bf16.msra.mxu0 0
      %663 = vmatprep.subr.bf16.mxu0 0
      %664 = vmatpush1.bf16.msra.mxu0 0
      %665 = vmatprep.subr.bf16.mxu0 0
      %666 = vmatpush1.bf16.msra.mxu0 0
      %667 = vmatprep.subr.bf16.mxu0 0
      %668 = vmatpush1.bf16.msra.mxu0 0
      %669 = vmatprep.subr.bf16.mxu0 0
      %670 = vmatpush1.bf16.msra.mxu0 0
      %671 = vmatprep.mubr.bf16.mxu0 0
      %672 = vmatmul.mubr.bf16.gmra.mrb[0].mxu0 %v637
      %v673 = vpop.f32.mrb[0].mxu0
      %v674 = vadd.f32 0.0, %v673
      %v675 = vpop.f32.mrb[0].mxu0
      %v676 = vpop.f32.mrb[0].mxu0
      %v677 = vpop.f32.mrb[0].mxu0
      %678 = vdwg.mxu0
      %v679 = vadd.f32 %v631, %v674
      %v680 = vxor.u32 %v679, 2147483648
      %v681 = vmul.f32 %v680, 1.442695
      %v682 = vpow.pop %v681
      %v683 = vadd.f32 %v682, 1.0
      %v684 = vrcp.pop %v683
      %v685 = vmul.f32 1.0, %v684
      %v686 = vtanh.pop %v679
      %v687 = vmul.f32 %v685, %v615
      %689 = vrot.lane.b32.xlu0 %v686, 32
      %v690 = vpop.permute.xlu0 %689
      %v692 = vmul.f32 %v685, %v690
      %694 = vrot.lane.b32.xlu0 %v692, 32
      %v695 = vpop.permute.xlu0 %694
      %v697 = vadd.f32 %v687, %v695
      %v698 = vtanh.pop %v697
      %700 = vrot.lane.b32.xlu0 %v698, 32
      %v701 = vpop.permute.xlu0 %700
      %v703 = vmul.f32 %v685, %v701
      %s704 = sadd.s32 %s622, 1
      %706 = vrot.lane.b32.xlu0 %v703, 64
      %v707 = vpop.permute.xlu0 %706
      %s709 = smul.u32 %s704, 8
      %s710 = scalar_lea.vmem [#allocation6], %s709
      %711 = vst.msk [vmem:[%s710] sm:$0xff] %vm549, %v707
      %v712 = vld [vmem:[#allocation2 + $0x10] sm:$0xff]
      %v713 = vadd.f32 %v712, %v531
      %v714 = vpack.c.bf16 %v703, %v703
      %716 = vrot.lane.b32.xlu0 %v714, 64
      %v717 = vpop.permute.xlu0 %716
      %v719 = vsel %vm549, %v717, 0
      %721 = vmatprep.subr.bf16.mxu0 0
      %722 = vmatpush1.bf16.msra.mxu0 %v545
      %723 = vmatprep.subr.bf16.mxu0 0
      %724 = vmatpush1.bf16.msra.mxu0 %v546
      %725 = vmatprep.subr.bf16.mxu0 0
      %726 = vmatpush1.bf16.msra.mxu0 0
      %727 = vmatprep.subr.bf16.mxu0 0
      %728 = vmatpush1.bf16.msra.mxu0 0
      %729 = vmatprep.subr.bf16.mxu0 0
      %730 = vmatpush1.bf16.msra.mxu0 0
      %731 = vmatprep.subr.bf16.mxu0 0
      %732 = vmatpush1.bf16.msra.mxu0 0
      %733 = vmatprep.subr.bf16.mxu0 0
      %734 = vmatpush1.bf16.msra.mxu0 0
      %735 = vmatprep.subr.bf16.mxu0 0
      %736 = vmatpush1.bf16.msra.mxu0 0
      %737 = vmatprep.subr.bf16.mxu0 0
      %738 = vmatpush1.bf16.msra.mxu0 0
      %739 = vmatprep.subr.bf16.mxu0 0
      %740 = vmatpush1.bf16.msra.mxu0 0
      %741 = vmatprep.subr.bf16.mxu0 0
      %742 = vmatpush1.bf16.msra.mxu0 0
      %743 = vmatprep.subr.bf16.mxu0 0
      %744 = vmatpush1.bf16.msra.mxu0 0
      %745 = vmatprep.subr.bf16.mxu0 0
      %746 = vmatpush1.bf16.msra.mxu0 0
      %747 = vmatprep.subr.bf16.mxu0 0
      %748 = vmatpush1.bf16.msra.mxu0 0
      %749 = vmatprep.subr.bf16.mxu0 0
      %750 = vmatpush1.bf16.msra.mxu0 0
      %751 = vmatprep.subr.bf16.mxu0 0
      %752 = vmatpush1.bf16.msra.mxu0 0
      %753 = vmatprep.mubr.bf16.mxu0 0
      %754 = vmatmul.mubr.bf16.gmra.mrb[0].mxu0 %v719
      %v755 = vpop.f32.mrb[0].mxu0
      %v756 = vadd.f32 0.0, %v755
      %v757 = vpop.f32.mrb[0].mxu0
      %v758 = vpop.f32.mrb[0].mxu0
      %v759 = vpop.f32.mrb[0].mxu0
      %760 = vdwg.mxu0
      %v761 = vadd.f32 %v713, %v756
      %v762 = vxor.u32 %v761, 2147483648
      %v763 = vmul.f32 %v762, 1.442695
      %v764 = vpow.pop %v763
      %v765 = vadd.f32 %v764, 1.0
      %v766 = vrcp.pop %v765
      %v767 = vmul.f32 1.0, %v766
      %v768 = vtanh.pop %v761
      %v769 = vmul.f32 %v767, %v697
      %771 = vrot.lane.b32.xlu0 %v768, 32
      %v772 = vpop.permute.xlu0 %771
      %v774 = vmul.f32 %v767, %v772
      %776 = vrot.lane.b32.xlu0 %v774, 32
      %v777 = vpop.permute.xlu0 %776
      %v779 = vadd.f32 %v769, %v777
      %v780 = vtanh.pop %v779
      %782 = vrot.lane.b32.xlu0 %v780, 32
      %v783 = vpop.permute.xlu0 %782
      %v785 = vmul.f32 %v767, %v783
      %s786 = sadd.s32 %s622, 2
      %788 = vrot.lane.b32.xlu0 %v785, 64
      %v789 = vpop.permute.xlu0 %788
      %s791 = smul.u32 %s786, 8
      %s792 = scalar_lea.vmem [#allocation6], %s791
      %793 = vst.msk [vmem:[%s792] sm:$0xff] %vm549, %v789
      %v794 = vld [vmem:[#allocation2 + $0x18] sm:$0xff]
      %v795 = vadd.f32 %v794, %v531
      %v796 = vpack.c.bf16 %v785, %v785
      %798 = vrot.lane.b32.xlu0 %v796, 64
      %v799 = vpop.permute.xlu0 %798
      %v801 = vsel %vm549, %v799, 0
      %803 = vmatprep.subr.bf16.mxu0 0
      %804 = vmatpush1.bf16.msra.mxu0 %v545
      %805 = vmatprep.subr.bf16.mxu0 0
      %806 = vmatpush1.bf16.msra.mxu0 %v546
      %807 = vmatprep.subr.bf16.mxu0 0
      %808 = vmatpush1.bf16.msra.mxu0 0
      %809 = vmatprep.subr.bf16.mxu0 0
      %810 = vmatpush1.bf16.msra.mxu0 0
      %811 = vmatprep.subr.bf16.mxu0 0
      %812 = vmatpush1.bf16.msra.mxu0 0
      %813 = vmatprep.subr.bf16.mxu0 0
      %814 = vmatpush1.bf16.msra.mxu0 0
      %815 = vmatprep.subr.bf16.mxu0 0
      %816 = vmatpush1.bf16.msra.mxu0 0
      %817 = vmatprep.subr.bf16.mxu0 0
      %818 = vmatpush1.bf16.msra.mxu0 0
      %819 = vmatprep.subr.bf16.mxu0 0
      %820 = vmatpush1.bf16.msra.mxu0 0
      %821 = vmatprep.subr.bf16.mxu0 0
      %822 = vmatpush1.bf16.msra.mxu0 0
      %823 = vmatprep.subr.bf16.mxu0 0
      %824 = vmatpush1.bf16.msra.mxu0 0
      %825 = vmatprep.subr.bf16.mxu0 0
      %826 = vmatpush1.bf16.msra.mxu0 0
      %827 = vmatprep.subr.bf16.mxu0 0
      %828 = vmatpush1.bf16.msra.mxu0 0
      %829 = vmatprep.subr.bf16.mxu0 0
      %830 = vmatpush1.bf16.msra.mxu0 0
      %831 = vmatprep.subr.bf16.mxu0 0
      %832 = vmatpush1.bf16.msra.mxu0 0
      %833 = vmatprep.subr.bf16.mxu0 0
      %834 = vmatpush1.bf16.msra.mxu0 0
      %835 = vmatprep.mubr.bf16.mxu0 0
      %836 = vmatmul.mubr.bf16.gmra.mrb[0].mxu0 %v801
      %v837 = vpop.f32.mrb[0].mxu0
      %v838 = vadd.f32 0.0, %v837
      %v839 = vpop.f32.mrb[0].mxu0
      %v840 = vpop.f32.mrb[0].mxu0
      %v841 = vpop.f32.mrb[0].mxu0
      %842 = vdwg.mxu0
      %v843 = vadd.f32 %v795, %v838
      %v844 = vxor.u32 %v843, 2147483648
      %v845 = vmul.f32 %v844, 1.442695
      %v846 = vpow.pop %v845
      %v847 = vadd.f32 %v846, 1.0
      %v848 = vrcp.pop %v847
      %v849 = vmul.f32 1.0, %v848
      %v850 = vtanh.pop %v843
      %v851 = vmul.f32 %v849, %v779
      %853 = vrot.lane.b32.xlu0 %v850, 32
      %v854 = vpop.permute.xlu0 %853
      %v856 = vmul.f32 %v849, %v854
      %858 = vrot.lane.b32.xlu0 %v856, 32
      %v859 = vpop.permute.xlu0 %858
      %v861 = vadd.f32 %v851, %v859
      %v862 = vtanh.pop %v861
      %864 = vrot.lane.b32.xlu0 %v862, 32
      %v865 = vpop.permute.xlu0 %864
      %v867 = vmul.f32 %v849, %v865
      %s868 = sadd.s32 %s622, 3
      %870 = vrot.lane.b32.xlu0 %v867, 64
      %v871 = vpop.permute.xlu0 %870
      %s873 = smul.u32 %s868, 8
      %s874 = scalar_lea.vmem [#allocation6], %s873
      %875 = vst.msk [vmem:[%s874] sm:$0xff] %vm549, %v871
      %876 = vst.msk [vmem:[#allocation4] sm:$0xff] %vm549, %v871
      %878 = vrot.lane.b32.xlu0 %v861, 96
      %v879 = vpop.permute.xlu0 %878
      %881 = vst.msk [vmem:[#allocation5] sm:$0xff] %vm549, %v879
      %p882 = scmp.eq.s32.totalorder %s25, 1
      // Predicated region
      $region61: #{tpu_custom_call.1} parent=55 // pred_check
        %p883 = pneg %p882
      $region62: #{tpu_custom_call.1} parent=55 // pred_check_branch
        %885 = sbr.rel (%p883) target = $region64
      $region63: #{tpu_custom_call.1} parent=55 // pred_region
        %v886 = vld [vmem:[%s6] sm:$0x1]
        %v887 = vld [vmem:[#allocation6] sm:$0xff]
        %v889 = vlaneseq
        %v890 = vshrl.u32 %v889, 7
        %v891 = vsub.s32 0, %v890
        %v892 = vrot.slane %v886, %v891
        %v894 = vmul.f32 %v887, %v892
        %v895 = vsel %vm549, %v894, 0.0
        %896 = vadd.xlane.f32.xlu0 %v895
        %v897 = vpop.xlane.xlu0 %896
        %s898 = scalar_lea.vmem [#allocation6], 8
        %v899 = vld [vmem:[%s898] sm:$0xff]
        %v900 = vmul.f32 %v899, %v892
        %v901 = vsel %vm549, %v900, 0.0
        %902 = vadd.xlane.f32.xlu0 %v901
        %v903 = vpop.xlane.xlu0 %902
        %v904 = vmax.f32 %v897, %v903
        %s905 = scalar_lea.vmem [#allocation6], 16
        %v906 = vld [vmem:[%s905] sm:$0xff]
        %v907 = vmul.f32 %v906, %v892
        %v908 = vsel %vm549, %v907, 0.0
        %909 = vadd.xlane.f32.xlu0 %v908
        %v910 = vpop.xlane.xlu0 %909
        %v911 = vmax.f32 %v904, %v910
        %s912 = scalar_lea.vmem [#allocation6], 24
        %v913 = vld [vmem:[%s912] sm:$0xff]
        %v914 = vmul.f32 %v913, %v892
        %v915 = vsel %vm549, %v914, 0.0
        %916 = vadd.xlane.f32.xlu0 %v915
        %v917 = vpop.xlane.xlu0 %916
        %v918 = vmax.f32 %v911, %v917
        %s919 = scalar_lea.vmem [#allocation6], 32
        %v920 = vld [vmem:[%s919] sm:$0xff]
        %v921 = vmul.f32 %v920, %v892
        %v922 = vsel %vm549, %v921, 0.0
        %923 = vadd.xlane.f32.xlu0 %v922
        %v924 = vpop.xlane.xlu0 %923
        %v925 = vmax.f32 %v918, %v924
        %s926 = scalar_lea.vmem [#allocation6], 40
        %v927 = vld [vmem:[%s926] sm:$0xff]
        %v928 = vmul.f32 %v927, %v892
        %v929 = vsel %vm549, %v928, 0.0
        %930 = vadd.xlane.f32.xlu0 %v929
        %v931 = vpop.xlane.xlu0 %930
        %v932 = vmax.f32 %v925, %v931
        %s933 = scalar_lea.vmem [#allocation6], 48
        %v934 = vld [vmem:[%s933] sm:$0xff]
        %v935 = vmul.f32 %v934, %v892
        %v936 = vsel %vm549, %v935, 0.0
        %937 = vadd.xlane.f32.xlu0 %v936
        %v938 = vpop.xlane.xlu0 %937
        %v939 = vmax.f32 %v932, %v938
        %s940 = scalar_lea.vmem [#allocation6], 56
        %v941 = vld [vmem:[%s940] sm:$0xff]
        %v942 = vmul.f32 %v941, %v892
        %v943 = vsel %vm549, %v942, 0.0
        %944 = vadd.xlane.f32.xlu0 %v943
        %v945 = vpop.xlane.xlu0 %944
        %v946 = vmax.f32 %v939, %v945
        %v947 = vsub.f32 %v897, %v946
        %v948 = vmul.f32 %v947, 1.442695
        %v949 = vpow.pop %v948
        %v950 = vadd.f32 %v949, 0.0
        %v951 = vmul.f32 %v949, %v887
        %v952 = vadd.f32 %v951, 0.0
        %v953 = vsub.f32 %v903, %v946
        %v954 = vmul.f32 %v953, 1.442695
        %v955 = vpow.pop %v954
        %v956 = vadd.f32 %v950, %v955
        %v957 = vmul.f32 %v955, %v899
        %v958 = vadd.f32 %v952, %v957
        %v959 = vsub.f32 %v910, %v946
        %v960 = vmul.f32 %v959, 1.442695
        %v961 = vpow.pop %v960
        %v962 = vadd.f32 %v956, %v961
        %v963 = vmul.f32 %v961, %v906
        %v964 = vadd.f32 %v958, %v963
        %v965 = vsub.f32 %v917, %v946
        %v966 = vmul.f32 %v965, 1.442695
        %v967 = vpow.pop %v966
        %v968 = vadd.f32 %v962, %v967
        %v969 = vmul.f32 %v967, %v913
        %v970 = vadd.f32 %v964, %v969
        %v971 = vsub.f32 %v924, %v946
        %v972 = vmul.f32 %v971, 1.442695
        %v973 = vpow.pop %v972
        %v974 = vadd.f32 %v968, %v973
        %v975 = vmul.f32 %v973, %v920
        %v976 = vadd.f32 %v970, %v975
        %v977 = vsub.f32 %v931, %v946
        %v978 = vmul.f32 %v977, 1.442695
        %v979 = vpow.pop %v978
        %v980 = vadd.f32 %v974, %v979
        %v981 = vmul.f32 %v979, %v927
        %v982 = vadd.f32 %v976, %v981
        %v983 = vsub.f32 %v938, %v946
        %v984 = vmul.f32 %v983, 1.442695
        %v985 = vpow.pop %v984
        %v986 = vadd.f32 %v980, %v985
        %v987 = vmul.f32 %v985, %v934
        %v988 = vadd.f32 %v982, %v987
        %v989 = vsub.f32 %v945, %v946
        %v990 = vmul.f32 %v989, 1.442695
        %v991 = vpow.pop %v990
        %v992 = vadd.f32 %v986, %v991
        %v993 = vmul.f32 %v991, %v941
        %v994 = vadd.f32 %v988, %v993
        %v995 = vrcp.pop %v992
        %v996 = vmul.f32 %v994, %v995
        %v997 = vpack.c.bf16 %v996, %v996
        %v998 = vld [vmem:[%s7] sm:$0xf]
        %v999 = vld [vmem:[%s7 + $0x4] sm:$0xf]
        %v1000 = vld [vmem:[%s7 + $0x8] sm:$0xf]
        %v1001 = vld [vmem:[%s7 + $0xc] sm:$0xf]
        %v1002 = vld [vmem:[%s8] sm:$0x1]
        %v1004 = vlaneseq
        %v1005 = vshrl.u32 %v1004, 7
        %v1006 = vsub.s32 0, %v1005
        %v1007 = vrot.slane %v1002, %v1006
        %v1013 = vunpack.c.l.b16 %v998
        %v1014 = vunpack.c.l.b16 %v999
        %v1015 = vunpack.c.l.b16 %v1000
        %v1016 = vunpack.c.l.b16 %v1001
        %v1017 = vpack.c.b16 %v1014, %v1013
        %v1018 = vpack.c.b16 %v1016, %v1015
        %v1022 = vsel %vm549, %v997, 0
        %1024 = vmatprep.subr.bf16.mxu0 0
        %1025 = vmatpush1.bf16.msra.mxu0 %v1017
        %1026 = vmatprep.subr.bf16.mxu0 0
        %1027 = vmatpush1.bf16.msra.mxu0 %v1018
        %1028 = vmatprep.subr.bf16.mxu0 0
        %1029 = vmatpush1.bf16.msra.mxu0 0
        %1030 = vmatprep.subr.bf16.mxu0 0
        %1031 = vmatpush1.bf16.msra.mxu0 0
        %1032 = vmatprep.subr.bf16.mxu0 0
        %1033 = vmatpush1.bf16.msra.mxu0 0
        %1034 = vmatprep.subr.bf16.mxu0 0
        %1035 = vmatpush1.bf16.msra.mxu0 0
        %1036 = vmatprep.subr.bf16.mxu0 0
        %1037 = vmatpush1.bf16.msra.mxu0 0
        %1038 = vmatprep.subr.bf16.mxu0 0
        %1039 = vmatpush1.bf16.msra.mxu0 0
        %1040 = vmatprep.subr.bf16.mxu0 0
        %1041 = vmatpush1.bf16.msra.mxu0 0
        %1042 = vmatprep.subr.bf16.mxu0 0
        %1043 = vmatpush1.bf16.msra.mxu0 0
        %1044 = vmatprep.subr.bf16.mxu0 0
        %1045 = vmatpush1.bf16.msra.mxu0 0
        %1046 = vmatprep.subr.bf16.mxu0 0
        %1047 = vmatpush1.bf16.msra.mxu0 0
        %1048 = vmatprep.subr.bf16.mxu0 0
        %1049 = vmatpush1.bf16.msra.mxu0 0
        %1050 = vmatprep.subr.bf16.mxu0 0
        %1051 = vmatpush1.bf16.msra.mxu0 0
        %1052 = vmatprep.subr.bf16.mxu0 0
        %1053 = vmatpush1.bf16.msra.mxu0 0
        %1054 = vmatprep.subr.bf16.mxu0 0
        %1055 = vmatpush1.bf16.msra.mxu0 0
        %1056 = vmatprep.mubr.bf16.mxu0 0
        %1057 = vmatmul.mubr.bf16.gmra.mrb[0].mxu0 %v1022
        %v1058 = vpop.f32.mrb[0].mxu0
        %v1059 = vadd.f32 %v1007, %v1058
        %v1060 = vpop.f32.mrb[0].mxu0
        %v1061 = vpop.f32.mrb[0].mxu0
        %v1062 = vpop.f32.mrb[0].mxu0
        %1063 = vdwg.mxu0
        %vm1064 = vcmask 23552
        %1065 = vst.msk [vmem:[%s375] sm:$0xff] %vm1064, %v1059
      $region64: #{tpu_custom_call.1} parent=55 // pred_fallthru
        _
      %p1066 = scmp.lt.s32.totalorder %s24, 0
      %s1067 = scalar_select %p1066, %s24, 0
      %s1068 = smul.addr %s1067, 8
      %s1069 = scalar_lea.vmem %s9, %s1068
      // Predicated region
      $region65: #{tpu_custom_call.1} parent=55 // pred_check
        %p1070 = pneg %p251
      $region66: #{tpu_custom_call.1} parent=55 // pred_check_branch
        %1072 = sbr.rel (%p1070) target = $region68
      $region67: #{tpu_custom_call.1} parent=55 // pred_region
        _
      $region68: #{tpu_custom_call.1} parent=55 // pred_fallthru
        _
      // Predicated region
      $region69: #{tpu_custom_call.1} parent=55 // pred_check
        %p1073 = pneg %p251
      $region70: #{tpu_custom_call.1} parent=55 // pred_check_branch
        %1075 = sbr.rel (%p1073) target = $region72
      $region71: #{tpu_custom_call.1} parent=55 // pred_region
        %p1076 = scmp.lt.s32.totalorder %s24, 0
        %s1077 = scalar_select %p1076, %s24, 0
        %s1078 = smul.addr %s1077, 8
        %s1079 = scalar_lea.vmem %s9, %s1078
      $region72: #{tpu_custom_call.1} parent=55 // pred_fallthru
        _
    $region56: #{tpu_custom_call.1} parent=5 // pred_fallthru
      _
    %p1080 = scmp.le.s32.totalorder 2, %s15
    // Predicated region
    $region73: #{tpu_custom_call.1} parent=5 // pred_check
      %p1081 = pneg %p1080
    $region74: #{tpu_custom_call.1} parent=5 // pred_check_branch
      %1083 = sbr.rel (%p1081) target = $region76
    $region75: #{tpu_custom_call.1} parent=5 // pred_region
      %s1084 = ssub.s32 %s15, 2
    $region76: #{tpu_custom_call.1} parent=5 // pred_fallthru
      _
  $region6: #{tpu_custom_call.1} parent=0 // loop_footer
    %s19 = sadd.s32 1, %s15
  $region7: #{tpu_custom_call.1} parent=0 // loop_footer_branch
    %14 = sbr.rel target = $region3
  $region8: #{tpu_custom_call.1} parent=0 // loop_exit
    _

</llo_original>
